<compile_context>
chip_gen: v7x
topology: tpu7x:2x2x1
jax: 0.10.0
libtpu: 0.0.40
codegen_flags: <defaults>
</compile_context>

<pallas_src>
import functools
import math

import jax
import jax.numpy as jnp
from jax import lax
from jax.experimental import pallas as pl
from jax.experimental.pallas import tpu as pltpu


def autopad(k, p=None):
    if p is None:
        p = k // 2 if isinstance(k, int) else [x // 2 for x in k]
    return p


def _conv_bn_gelu_kernel(x_ref, w_ref, shift_ref, o_ref, patch_ref,
                         *, k, stride, approximate):
    """One grid step = one (image, output-row-block) pair.

    x_ref     : (1, Hp, Wp, C1)        padded NHWC input (full image, revisited)
    w_ref     : (K*K*C1, C2p)          conv weight with BN scale folded in
    shift_ref : (1, C2p)               fused BN shift
    o_ref     : (1, TH, Wo, C2p)       output row block (lane-dense C2p)
    patch_ref : (TH*Wo, K*K*C1) VMEM   im2col patch scratch
    """
    TH, Wo, C2p = o_ref.shape[1], o_ref.shape[2], o_ref.shape[3]
    C1 = x_ref.shape[3]

    r = pl.program_id(1)
    row0 = pl.multiple_of(r * (TH * stride), TH * stride)  # first padded input row

    # --- im2col: pack the K*K taps into the patch scratch (column-major in
    #     (kh, kw, c1) order, matching the wrapper's weight reshape). ---------
    for kh in range(k):
        for kw in range(k):
            if stride == 1:
                sl = x_ref[0, pl.ds(row0 + kh, TH), pl.ds(kw, Wo), :]
            else:
                sl = x_ref[0, pl.ds(row0 + kh, TH, stride=stride),
                           pl.ds(kw, Wo, stride=stride), :]
            t = kh * k + kw
            patch_ref[:, t * C1:(t + 1) * C1] = sl.reshape(TH * Wo, C1)

    # --- single large-contraction MXU matmul, f32 accumulation --------------
    acc = jnp.dot(patch_ref[...], w_ref[...],
                  preferred_element_type=jnp.float32)       # (TH*Wo, C2p)

    # Fused BatchNorm: scale already folded into the weight, only shift left.
    y = acc + shift_ref[...]

    # GELU epilogue in f32.
    if approximate:
        # tanh-based GELU: transcendental routed to the EUP slot.
        c = jnp.float32(0.7978845608028654)   # sqrt(2/pi)
        y = 0.5 * y * (1.0 + jnp.tanh(c * (y + jnp.float32(0.044715) * y * y * y)))
    else:
        # exact erf GELU (matches torch.nn.GELU() default).
        y = 0.5 * y * (1.0 + lax.erf(y * jnp.float32(1.0 / math.sqrt(2.0))))

    o_ref[...] = y.reshape(1, TH, Wo, C2p).astype(o_ref.dtype)


def _pick_row_block(Ho, Wo, C2p, budget_bytes=1 << 20):
    """Largest divisor of Ho whose f32 output tile fits the budget; prefer at
    least two row blocks so both v7x TensorCores get work even when N == 1."""
    divs = [d for d in range(1, Ho + 1) if Ho % d == 0]
    fitting = [d for d in divs if d * Wo * C2p * 4 <= budget_bytes] or [1]
    best = max(fitting)
    if best == Ho and Ho > 1:
        smaller = [d for d in fitting if d < Ho]
        if smaller:
            best = max(smaller)
    return best


def conv_bn_gelu(x_nchw, weight_oihw, gamma, beta, running_mean, running_var,
                 *, stride=1, padding=None, eps=1e-5, row_block=None,
                 approximate_gelu=False):
    """Pallas implementation of Conv.forward (conv -> BN(eval) -> GELU).

    x_nchw      : (N, C1, H, W)
    weight_oihw : (C2, C1, K, K)   (bias=False, groups=1)
    gamma/beta/running_mean/running_var : (C2,)
    returns     : (N, C2, Ho, Wo)  NCHW, matching PyTorch
    """
    N, C1, H, W = x_nchw.shape
    C2, C1w, K, K2 = weight_oihw.shape
    assert C1w == C1 and K == K2, "groups != 1 not supported"
    p = autopad(K, padding)
    s = stride

    Ho = (H + 2 * p - K) // s + 1
    Wo = (W + 2 * p - K) // s + 1

    # ---- glue (plain JAX): layout, padding, BN folding ----------------------
    x_nhwc = jnp.transpose(x_nchw, (0, 2, 3, 1))                     # NHWC
    x_pad = jnp.pad(x_nhwc, ((0, 0), (p, p), (p, p), (0, 0)))
    Hp, Wp = H + 2 * p, W + 2 * p

    scale = gamma / jnp.sqrt(running_var + eps)                      # (C2,)
    shift = beta - running_mean * scale                              # (C2,)

    # Fold BN scale into the weight; reshape to (K*K*C1, C2) in (kh,kw,c1) order.
    w_hwio = jnp.transpose(weight_oihw, (2, 3, 1, 0))                # (K,K,C1,C2)
    w_hwio = (w_hwio * scale[None, None, None, :]).astype(weight_oihw.dtype)
    w2d = w_hwio.reshape(K * K * C1, C2)

    # Lane-dense output channels: pad C2 up to a multiple of 128.
    LANE = 128
    C2p = ((C2 + LANE - 1) // LANE) * LANE
    pad_c = C2p - C2
    if pad_c:
        w2d = jnp.pad(w2d, ((0, 0), (0, pad_c)))
        shift = jnp.pad(shift, (0, pad_c))
    shift2d = shift.reshape(1, C2p).astype(jnp.float32)

    if row_block is None:
        row_block = _pick_row_block(Ho, Wo, C2p)
    TH = row_block
    assert Ho % TH == 0, (Ho, TH)
    n_row_blocks = Ho // TH

    # Explicit VMEM budget (generation-aware headroom; v7x scoped default is
    # smaller than v5e/v6e, so don't rely on the default).
    itemsize = x_pad.dtype.itemsize
    x_blk = Hp * Wp * C1 * itemsize
    w_blk = K * K * C1 * C2p * w2d.dtype.itemsize
    sh_blk = C2p * 4
    out_blk = TH * Wo * C2p * itemsize
    patch_blk = TH * Wo * K * K * C1 * itemsize
    vmem_est = 2 * (x_blk + w_blk + sh_blk + out_blk) + patch_blk
    vmem_limit = int(min(max(2 * vmem_est, 16 * 2 ** 20), 48 * 2 ** 20))

    kernel = functools.partial(_conv_bn_gelu_kernel, k=K, stride=s,
                               approximate=approximate_gelu)

    out_nhwc = pl.pallas_call(
        kernel,
        out_shape=jax.ShapeDtypeStruct((N, Ho, Wo, C2p), x_nchw.dtype),
        grid_spec=pltpu.PrefetchScalarGridSpec(
            num_scalar_prefetch=0,
            grid=(N, n_row_blocks),
            in_specs=[
                # Full padded image per n; block index ignores r so it stays
                # resident across the row blocks of the same image.
                pl.BlockSpec((1, Hp, Wp, C1), lambda n, r: (n, 0, 0, 0)),
                pl.BlockSpec((K * K * C1, C2p), lambda n, r: (0, 0)),
                pl.BlockSpec((1, C2p), lambda n, r: (0, 0)),
            ],
            out_specs=pl.BlockSpec((1, TH, Wo, C2p),
                                   lambda n, r: (n, r, 0, 0)),
            scratch_shapes=[pltpu.VMEM((TH * Wo, K * K * C1), x_pad.dtype)],
        ),
        compiler_params=pltpu.CompilerParams(
            dimension_semantics=("parallel", "parallel"),
            vmem_limit_bytes=vmem_limit),
    )(x_pad, w2d, shift2d)

    # Drop channel padding and go back to NCHW (fuses into one copy under XLA).
    out_nhwc = out_nhwc[..., :C2]
    return jnp.transpose(out_nhwc, (0, 3, 1, 2))


def _reference(x_nchw, weight_oihw, gamma, beta, running_mean, running_var,
               *, stride=1, padding=None, eps=1e-5):
    """Pure-JAX reference (lax conv) for the correctness check."""
    K = weight_oihw.shape[2]
    p = autopad(K, padding)
    y = lax.conv_general_dilated(
        x_nchw, weight_oihw,
        window_strides=(stride, stride),
        padding=((p, p), (p, p)),
        dimension_numbers=("NCHW", "OIHW", "NCHW"))
    scale = (gamma / jnp.sqrt(running_var + eps)).reshape(1, -1, 1, 1)
    shift = (beta - running_mean * gamma / jnp.sqrt(running_var + eps)
             ).reshape(1, -1, 1, 1)
    y = y * scale + shift
    return jax.nn.gelu(y, approximate=False)


if __name__ == "__main__":
    # Small shapes consistent with the module: Conv(c1=4, c2=8, k=3, s=1)
    N, C1, C2, H, W, K = 2, 4, 8, 16, 16, 3

    key = jax.random.PRNGKey(0)
    kx, kw, kg, kb, km, kv = jax.random.split(key, 6)

    x = jax.random.normal(kx, (N, C1, H, W), dtype=jnp.float32)
    weight = jax.random.normal(kw, (C2, C1, K, K), dtype=jnp.float32) * 0.1
    gamma = 1.0 + 0.1 * jax.random.normal(kg, (C2,), dtype=jnp.float32)
    beta = 0.1 * jax.random.normal(kb, (C2,), dtype=jnp.float32)
    running_mean = 0.1 * jax.random.normal(km, (C2,), dtype=jnp.float32)
    running_var = 1.0 + 0.1 * jax.random.uniform(kv, (C2,), dtype=jnp.float32)

    out = conv_bn_gelu(x, weight, gamma, beta, running_mean, running_var)
    out = jax.block_until_ready(out)

    ref = _reference(x, weight, gamma, beta, running_mean, running_var)
    assert out.shape == (N, C2, H, W), out.shape
    assert jnp.allclose(out, ref, atol=1e-4, rtol=1e-4), (
        float(jnp.max(jnp.abs(out - ref))))

    print("KERNEL_OK")
</pallas_src>

<mosaic_0001>
module attributes {stable_mosaic.version = 11 : i64} {
  func.func @_conv_bn_gelu_kernel(%arg0: i32, %arg1: i32, %arg2: memref<1x18x18x4xf32, #tpu.memory_space<vmem>>, %arg3: memref<36x128xf32, #tpu.memory_space<vmem>>, %arg4: memref<1x128xf32, #tpu.memory_space<vmem>>, %arg5: memref<1x8x16x128xf32, #tpu.memory_space<vmem>>, %arg6: memref<128x36xf32, #tpu.memory_space<vmem>>) attributes {dimension_semantics = [#tpu.dimension_semantics<parallel>, #tpu.dimension_semantics<parallel>], iteration_bounds = array<i64: 2, 2>, scalar_prefetch = 0 : i64, scratch_operands = 1 : i64, tpu.core_type = #tpu.core_type<tc>, window_params = [{transform_indices = @transform_0, window_bounds = array<i64: 1, 18, 18, 4>}, {pipeline_mode = #tpu.pipeline_mode<synchronous>, transform_indices = @transform_1, window_bounds = array<i64: 36, 128>}, {pipeline_mode = #tpu.pipeline_mode<synchronous>, transform_indices = @transform_2, window_bounds = array<i64: 1, 128>}, {transform_indices = @transform_3, window_bounds = array<i64: 1, 8, 16, 128>}]} {
    %c8_i32 = arith.constant 8 : i32
    %0 = arith.muli %arg1, %c8_i32 : i32
    %1 = tpu.assume_multiple %0, 8 : i32
    %c0_i32 = arith.constant 0 : i32
    %2 = arith.addi %1, %c0_i32 : i32
    %c0 = arith.constant 0 : index
    %3 = arith.index_cast %2 : i32 to index
    %c0_0 = arith.constant 0 : index
    %c0_1 = arith.constant 0 : index
    %4 = vector.load %arg2[%c0, %3, %c0_0, %c0_1] : memref<1x18x18x4xf32, #tpu.memory_space<vmem>>, vector<1x8x16x4xf32>
    %5 = vector.shape_cast %4 : vector<1x8x16x4xf32> to vector<8x16x4xf32>
    %6 = vector.shape_cast %5 : vector<8x16x4xf32> to vector<128x4xf32>
    %c0_2 = arith.constant 0 : index
    %c0_3 = arith.constant 0 : index
    %7 = vector.load %arg6[%c0_2, %c0_3] : memref<128x36xf32, #tpu.memory_space<vmem>>, vector<128x4xf32>
    tpu.vector_store %arg6[%c0_2, %c0_3], %6 {strides = array<i32>} : memref<128x36xf32, #tpu.memory_space<vmem>>, vector<128x4xf32>,
    %c0_i32_4 = arith.constant 0 : i32
    %8 = arith.addi %1, %c0_i32_4 : i32
    %c0_5 = arith.constant 0 : index
    %9 = arith.index_cast %8 : i32 to index
    %c1 = arith.constant 1 : index
    %c0_6 = arith.constant 0 : index
    %10 = vector.load %arg2[%c0_5, %9, %c1, %c0_6] : memref<1x18x18x4xf32, #tpu.memory_space<vmem>>, vector<1x8x16x4xf32>
    %11 = vector.shape_cast %10 : vector<1x8x16x4xf32> to vector<8x16x4xf32>
    %12 = vector.shape_cast %11 : vector<8x16x4xf32> to vector<128x4xf32>
    %c0_7 = arith.constant 0 : index
    %c4 = arith.constant 4 : index
    %13 = vector.load %arg6[%c0_7, %c4] : memref<128x36xf32, #tpu.memory_space<vmem>>, vector<128x4xf32>
    tpu.vector_store %arg6[%c0_7, %c4], %12 {strides = array<i32>} : memref<128x36xf32, #tpu.memory_space<vmem>>, vector<128x4xf32>,
    %c0_i32_8 = arith.constant 0 : i32
    %14 = arith.addi %1, %c0_i32_8 : i32
    %c0_9 = arith.constant 0 : index
    %15 = arith.index_cast %14 : i32 to index
    %c2 = arith.constant 2 : index
    %c0_10 = arith.constant 0 : index
    %16 = vector.load %arg2[%c0_9, %15, %c2, %c0_10] : memref<1x18x18x4xf32, #tpu.memory_space<vmem>>, vector<1x8x16x4xf32>
    %17 = vector.shape_cast %16 : vector<1x8x16x4xf32> to vector<8x16x4xf32>
    %18 = vector.shape_cast %17 : vector<8x16x4xf32> to vector<128x4xf32>
    %c0_11 = arith.constant 0 : index
    %c8 = arith.constant 8 : index
    %19 = vector.load %arg6[%c0_11, %c8] : memref<128x36xf32, #tpu.memory_space<vmem>>, vector<128x4xf32>
    tpu.vector_store %arg6[%c0_11, %c8], %18 {strides = array<i32>} : memref<128x36xf32, #tpu.memory_space<vmem>>, vector<128x4xf32>,
    %c1_i32 = arith.constant 1 : i32
    %20 = arith.addi %1, %c1_i32 : i32
    %c0_12 = arith.constant 0 : index
    %21 = arith.index_cast %20 : i32 to index
    %c0_13 = arith.constant 0 : index
    %c0_14 = arith.constant 0 : index
    %22 = vector.load %arg2[%c0_12, %21, %c0_13, %c0_14] : memref<1x18x18x4xf32, #tpu.memory_space<vmem>>, vector<1x8x16x4xf32>
    %23 = vector.shape_cast %22 : vector<1x8x16x4xf32> to vector<8x16x4xf32>
    %24 = vector.shape_cast %23 : vector<8x16x4xf32> to vector<128x4xf32>
    %c0_15 = arith.constant 0 : index
    %c12 = arith.constant 12 : index
    %25 = vector.load %arg6[%c0_15, %c12] : memref<128x36xf32, #tpu.memory_space<vmem>>, vector<128x4xf32>
    tpu.vector_store %arg6[%c0_15, %c12], %24 {strides = array<i32>} : memref<128x36xf32, #tpu.memory_space<vmem>>, vector<128x4xf32>,
    %c1_i32_16 = arith.constant 1 : i32
    %26 = arith.addi %1, %c1_i32_16 : i32
    %c0_17 = arith.constant 0 : index
    %27 = arith.index_cast %26 : i32 to index
    %c1_18 = arith.constant 1 : index
    %c0_19 = arith.constant 0 : index
    %28 = vector.load %arg2[%c0_17, %27, %c1_18, %c0_19] : memref<1x18x18x4xf32, #tpu.memory_space<vmem>>, vector<1x8x16x4xf32>
    %29 = vector.shape_cast %28 : vector<1x8x16x4xf32> to vector<8x16x4xf32>
    %30 = vector.shape_cast %29 : vector<8x16x4xf32> to vector<128x4xf32>
    %c0_20 = arith.constant 0 : index
    %c16 = arith.constant 16 : index
    %31 = vector.load %arg6[%c0_20, %c16] : memref<128x36xf32, #tpu.memory_space<vmem>>, vector<128x4xf32>
    tpu.vector_store %arg6[%c0_20, %c16], %30 {strides = array<i32>} : memref<128x36xf32, #tpu.memory_space<vmem>>, vector<128x4xf32>,
    %c1_i32_21 = arith.constant 1 : i32
    %32 = arith.addi %1, %c1_i32_21 : i32
    %c0_22 = arith.constant 0 : index
    %33 = arith.index_cast %32 : i32 to index
    %c2_23 = arith.constant 2 : index
    %c0_24 = arith.constant 0 : index
    %34 = vector.load %arg2[%c0_22, %33, %c2_23, %c0_24] : memref<1x18x18x4xf32, #tpu.memory_space<vmem>>, vector<1x8x16x4xf32>
    %35 = vector.shape_cast %34 : vector<1x8x16x4xf32> to vector<8x16x4xf32>
    %36 = vector.shape_cast %35 : vector<8x16x4xf32> to vector<128x4xf32>
    %c0_25 = arith.constant 0 : index
    %c20 = arith.constant 20 : index
    %37 = vector.load %arg6[%c0_25, %c20] : memref<128x36xf32, #tpu.memory_space<vmem>>, vector<128x4xf32>
    tpu.vector_store %arg6[%c0_25, %c20], %36 {strides = array<i32>} : memref<128x36xf32, #tpu.memory_space<vmem>>, vector<128x4xf32>,
    %c2_i32 = arith.constant 2 : i32
    %38 = arith.addi %1, %c2_i32 : i32
    %c0_26 = arith.constant 0 : index
    %39 = arith.index_cast %38 : i32 to index
    %c0_27 = arith.constant 0 : index
    %c0_28 = arith.constant 0 : index
    %40 = vector.load %arg2[%c0_26, %39, %c0_27, %c0_28] : memref<1x18x18x4xf32, #tpu.memory_space<vmem>>, vector<1x8x16x4xf32>
    %41 = vector.shape_cast %40 : vector<1x8x16x4xf32> to vector<8x16x4xf32>
    %42 = vector.shape_cast %41 : vector<8x16x4xf32> to vector<128x4xf32>
    %c0_29 = arith.constant 0 : index
    %c24 = arith.constant 24 : index
    %43 = vector.load %arg6[%c0_29, %c24] : memref<128x36xf32, #tpu.memory_space<vmem>>, vector<128x4xf32>
    tpu.vector_store %arg6[%c0_29, %c24], %42 {strides = array<i32>} : memref<128x36xf32, #tpu.memory_space<vmem>>, vector<128x4xf32>,
    %c2_i32_30 = arith.constant 2 : i32
    %44 = arith.addi %1, %c2_i32_30 : i32
    %c0_31 = arith.constant 0 : index
    %45 = arith.index_cast %44 : i32 to index
    %c1_32 = arith.constant 1 : index
    %c0_33 = arith.constant 0 : index
    %46 = vector.load %arg2[%c0_31, %45, %c1_32, %c0_33] : memref<1x18x18x4xf32, #tpu.memory_space<vmem>>, vector<1x8x16x4xf32>
    %47 = vector.shape_cast %46 : vector<1x8x16x4xf32> to vector<8x16x4xf32>
    %48 = vector.shape_cast %47 : vector<8x16x4xf32> to vector<128x4xf32>
    %c0_34 = arith.constant 0 : index
    %c28 = arith.constant 28 : index
    %49 = vector.load %arg6[%c0_34, %c28] : memref<128x36xf32, #tpu.memory_space<vmem>>, vector<128x4xf32>
    tpu.vector_store %arg6[%c0_34, %c28], %48 {strides = array<i32>} : memref<128x36xf32, #tpu.memory_space<vmem>>, vector<128x4xf32>,
    %c2_i32_35 = arith.constant 2 : i32
    %50 = arith.addi %1, %c2_i32_35 : i32
    %c0_36 = arith.constant 0 : index
    %51 = arith.index_cast %50 : i32 to index
    %c2_37 = arith.constant 2 : index
    %c0_38 = arith.constant 0 : index
    %52 = vector.load %arg2[%c0_36, %51, %c2_37, %c0_38] : memref<1x18x18x4xf32, #tpu.memory_space<vmem>>, vector<1x8x16x4xf32>
    %53 = vector.shape_cast %52 : vector<1x8x16x4xf32> to vector<8x16x4xf32>
    %54 = vector.shape_cast %53 : vector<8x16x4xf32> to vector<128x4xf32>
    %c0_39 = arith.constant 0 : index
    %c32 = arith.constant 32 : index
    %55 = vector.load %arg6[%c0_39, %c32] : memref<128x36xf32, #tpu.memory_space<vmem>>, vector<128x4xf32>
    tpu.vector_store %arg6[%c0_39, %c32], %54 {strides = array<i32>} : memref<128x36xf32, #tpu.memory_space<vmem>>, vector<128x4xf32>,
    %c0_40 = arith.constant 0 : index
    %c0_41 = arith.constant 0 : index
    %56 = vector.load %arg6[%c0_40, %c0_41] : memref<128x36xf32, #tpu.memory_space<vmem>>, vector<128x36xf32>
    %c0_42 = arith.constant 0 : index
    %c0_43 = arith.constant 0 : index
    %57 = vector.load %arg3[%c0_42, %c0_43] : memref<36x128xf32, #tpu.memory_space<vmem>>, vector<36x128xf32>
    %cst = arith.constant dense<0.000000e+00> : vector<128x128xf32>
    %58 = tpu.matmul %56, %57, %cst {dimension_numbers = #tpu.dot_dimension_numbers<[1], [0], [0], [1], [0, 0, 1, 1], [], []>} : vector<128x36xf32>, vector<36x128xf32>, vector<128x128xf32> -> vector<128x128xf32>
    %c0_44 = arith.constant 0 : index
    %c0_45 = arith.constant 0 : index
    %59 = vector.load %arg4[%c0_44, %c0_45] : memref<1x128xf32, #tpu.memory_space<vmem>>, vector<1x128xf32>
    %60 = vector.broadcast %59 : vector<1x128xf32> to vector<128x128xf32>
    %61 = arith.addf %58, %60 : vector<128x128xf32>
    %cst_46 = arith.constant 5.000000e-01 : f32
    %62 = vector.broadcast %cst_46 : f32 to vector<128x128xf32>
    %63 = arith.mulf %62, %61 : vector<128x128xf32>
    %cst_47 = arith.constant 0.707106769 : f32
    %64 = vector.broadcast %cst_47 : f32 to vector<128x128xf32>
    %65 = arith.mulf %61, %64 : vector<128x128xf32>
    %66 = math.erf %65 : vector<128x128xf32>
    %cst_48 = arith.constant 1.000000e+00 : f32
    %67 = vector.broadcast %cst_48 : f32 to vector<128x128xf32>
    %68 = arith.addf %67, %66 : vector<128x128xf32>
    %69 = arith.mulf %63, %68 : vector<128x128xf32>
    %70 = vector.shape_cast %69 : vector<128x128xf32> to vector<1x8x16x128xf32>
    %c0_49 = arith.constant 0 : index
    %c0_50 = arith.constant 0 : index
    %c0_51 = arith.constant 0 : index
    %c0_52 = arith.constant 0 : index
    %71 = vector.load %arg5[%c0_49, %c0_50, %c0_51, %c0_52] : memref<1x8x16x128xf32, #tpu.memory_space<vmem>>, vector<1x8x16x128xf32>
    tpu.vector_store %arg5[%c0_49, %c0_50, %c0_51, %c0_52], %70 {strides = array<i32>} : memref<1x8x16x128xf32, #tpu.memory_space<vmem>>, vector<1x8x16x128xf32>,
    return
  }
  func.func @transform_0(%arg0: i32, %arg1: i32) -> (i32, i32, i32, i32) {
    %c0_i32 = arith.constant 0 : i32
    %c0_i32_0 = arith.constant 0 : i32
    %c0_i32_1 = arith.constant 0 : i32
    %c0_i32_2 = arith.constant 0 : i32
    return %arg0, %c0_i32, %c0_i32_0, %c0_i32_1 : i32, i32, i32, i32
  }
  func.func @transform_1(%arg0: i32, %arg1: i32) -> (i32, i32) {
    %c0_i32 = arith.constant 0 : i32
    %c0_i32_0 = arith.constant 0 : i32
    %c0_i32_1 = arith.constant 0 : i32
    return %c0_i32, %c0_i32_0 : i32, i32
  }
  func.func @transform_2(%arg0: i32, %arg1: i32) -> (i32, i32) {
    %c0_i32 = arith.constant 0 : i32
    %c0_i32_0 = arith.constant 0 : i32
    %c0_i32_1 = arith.constant 0 : i32
    return %c0_i32, %c0_i32_0 : i32, i32
  }
  func.func @transform_3(%arg0: i32, %arg1: i32) -> (i32, i32, i32, i32) {
    %c0_i32 = arith.constant 0 : i32
    %c0_i32_0 = arith.constant 0 : i32
    %c0_i32_1 = arith.constant 0 : i32
    return %arg0, %arg1, %c0_i32, %c0_i32_0 : i32, i32, i32, i32
  }
}

</mosaic_0001>

<llo_original>
// kernel: tpu_custom_call.1
$region0: #{tpu_custom_call.1}
  #allocation0 [shape = 'u32[]', space=smem, size = 0x4, offset = 0x4, fixed_abs, tag = 'smem constant byte address 0x4 - core index']
  #allocation1 [shape = 'u32[144,128]{1,0:T(1,128)}', space=vmem, size = 0x12000, scoped, tag = 'internal scratch']
  #allocation2 [shape = 'f32[128,36]{1,0:T(8,128)}', space=vmem, size = 0x10000, scoped, tag = 'scratch operand']
  %s0 = inlined_call_operand.vmem [shape: f32[2,18,18,4], index: 0, kind: input, shape index: {}]
  %s1 = inlined_call_operand.vmem [shape: f32[36,128], index: 1, kind: input, shape index: {}]
  %s2 = inlined_call_operand.vmem [shape: f32[1,128], index: 2, kind: input, shape index: {}]
  %s3 = inlined_call_operand.hbm [shape: f32[2,16,16,128], index: 3, kind: output, shape index: {}]
  %s4 = sld [smem:[#allocation0]]
  $region45: #{tpu_custom_call.1} parent=0
    _
  %s6 = ssub.s32 1, %s4
  %s7 = scalar_select 0, %s6, %s4
  $region1: #{tpu_custom_call.1} parent=0
    #allocation3 [shape = 'u8[131072]{0}', space=vmem, size = 0x20000, scoped, tag = 'output window, operand 0']
    #allocation4 [shape = 's32[2]{0}', space=sflag, size = 0x8, scoped, tag = 'scoped memory for tpu_custom_call.1']
    %8 = vsyncpa [#allocation4], 0
    %s9 = scalar_lea.sflag [#allocation4], 1
    %10 = vsyncpa %s9, 0
    loop: start=0, step=1, limit=6
    $region2: #{tpu_custom_call.1} parent=1 // loop_pre_header
      _
    $region3: #{tpu_custom_call.1} parent=1 // loop_header
      %s12 = sphi 0, %s16
      %p13 = scmp.ge.s32.totalorder %s12, 6
      %s19 = sphi 0, %s31
      %s20 = sphi 0, %s27
      %s21 = sphi 0, %s19
      %s22 = sphi 0, %s20
      %s23 = sphi 0, %s21
      %s24 = sphi 0, %s22
      %s34 = sphi 0, %s36
      %s37 = sphi 0, %s34
      %s38 = sphi 0, %s37
      %s54 = sphi 0, %s38
      %s58 = sphi 0, %s58
      %s60 = sphi 0, %s58
      %s61 = sphi 0, %s60
      %s75 = sphi 0, %s61
      %s79 = sphi 0, %s79
      %s81 = sphi 0, %s79
      %s82 = sphi 0, %s81
      %s96 = sphi 0, %s82
      %s104 = sphi 0, %s106
      %s107 = sphi 0, %s104
      %s108 = sphi 0, %s107
      %s124 = sphi 0, %s108
    $region4: #{tpu_custom_call.1} parent=1 // loop_header_branch
      %15 = sbr.rel (%p13) target = $region8
    $region5: #{tpu_custom_call.1} parent=1 // loop_body
      %s17 = ssub.s32 %s12, 1
      %s18 = ssub.s32 %s12, 2
      %s25 = sadd.s32 1, %s20
      %p26 = scmp.ge.s32.totalorder %s25, 2
      %s27 = scalar_select %p26, 0, %s25
      %s28 = sadd.s32 1, %s19
      %s29 = scalar_select %p26, %s28, %s19
      %p30 = scmp.ge.s32.totalorder %s29, 2
      %s31 = scalar_select %p30, 0, %s29
      %s32 = ssub.s32 %s19, %s31
      %p33 = scmp.eq.s32.totalorder %s32, 0
      %s35 = sadd.s32 %s34, 1
      %s36 = scalar_select %p33, %s34, %s35
      %p39 = pneg %p33
      %p40 = scmp.eq.s32.totalorder %s12, 3
      %p41 = por %p39, %p40
      %p42 = scmp.ne.s32.totalorder %s34, %s37
      %p43 = scmp.eq.s32.totalorder %s12, 0
      %p44 = por %p42, %p43
      %p45 = scmp.ne.s32.totalorder %s34, %s37
      %p46 = scmp.eq.s32.totalorder %s17, 3
      %p47 = por %p45, %p46
      %p48 = scmp.ne.s32.totalorder %s37, %s38
      %p49 = scmp.eq.s32.totalorder %s17, 0
      %p50 = por %p48, %p49
      %p51 = scmp.ne.s32.totalorder %s37, %s38
      %p52 = scmp.eq.s32.totalorder %s18, 3
      %p53 = por %p51, %p52
      %p55 = scmp.ne.s32.totalorder %s38, %s54
      %p56 = scmp.eq.s32.totalorder %s18, 0
      %p57 = por %p55, %p56
      %s59 = sadd.s32 %s58, 1
      %p62 = scmp.eq.s32.totalorder %s12, 3
      %p63 = scmp.ne.s32.totalorder %s58, %s60
      %p64 = scmp.eq.s32.totalorder %s12, 0
      %p65 = por %p63, %p64
      %p66 = scmp.ne.s32.totalorder %s58, %s60
      %p67 = scmp.eq.s32.totalorder %s17, 3
      %p68 = por %p66, %p67
      %p69 = scmp.ne.s32.totalorder %s60, %s61
      %p70 = scmp.eq.s32.totalorder %s17, 0
      %p71 = por %p69, %p70
      %p72 = scmp.ne.s32.totalorder %s60, %s61
      %p73 = scmp.eq.s32.totalorder %s18, 3
      %p74 = por %p72, %p73
      %p76 = scmp.ne.s32.totalorder %s61, %s75
      %p77 = scmp.eq.s32.totalorder %s18, 0
      %p78 = por %p76, %p77
      %s80 = sadd.s32 %s79, 1
      %p83 = scmp.eq.s32.totalorder %s12, 3
      %p84 = scmp.ne.s32.totalorder %s79, %s81
      %p85 = scmp.eq.s32.totalorder %s12, 0
      %p86 = por %p84, %p85
      %p87 = scmp.ne.s32.totalorder %s79, %s81
      %p88 = scmp.eq.s32.totalorder %s17, 3
      %p89 = por %p87, %p88
      %p90 = scmp.ne.s32.totalorder %s81, %s82
      %p91 = scmp.eq.s32.totalorder %s17, 0
      %p92 = por %p90, %p91
      %p93 = scmp.ne.s32.totalorder %s81, %s82
      %p94 = scmp.eq.s32.totalorder %s18, 3
      %p95 = por %p93, %p94
      %p97 = scmp.ne.s32.totalorder %s82, %s96
      %p98 = scmp.eq.s32.totalorder %s18, 0
      %p99 = por %p97, %p98
      %s100 = ssub.s32 %s19, %s31
      %s101 = ssub.s32 %s20, %s27
      %s102 = sor.u32 %s100, %s101
      %p103 = scmp.eq.s32.totalorder %s102, 0
      %s105 = sadd.s32 %s104, 1
      %s106 = scalar_select %p103, %s104, %s105
      %p109 = pneg %p103
      %p110 = scmp.eq.s32.totalorder %s12, 3
      %p111 = por %p109, %p110
      %p112 = scmp.ne.s32.totalorder %s104, %s107
      %p113 = scmp.eq.s32.totalorder %s12, 0
      %p114 = por %p112, %p113
      %p115 = scmp.ne.s32.totalorder %s104, %s107
      %p116 = scmp.eq.s32.totalorder %s17, 3
      %p117 = por %p115, %p116
      %p118 = scmp.ne.s32.totalorder %s107, %s108
      %p119 = scmp.eq.s32.totalorder %s17, 0
      %p120 = por %p118, %p119
      %p121 = scmp.ne.s32.totalorder %s107, %s108
      %p122 = scmp.eq.s32.totalorder %s18, 3
      %p123 = por %p121, %p122
      %p125 = scmp.ne.s32.totalorder %s108, %s124
      %p126 = scmp.eq.s32.totalorder %s18, 0
      %p127 = por %p125, %p126
      %p128 = scmp.le.s32.totalorder 1, %s12
      %p129 = scmp.lt.s32.totalorder %s12, 5
      %p130 = pnand %p128, %p129
      %p131 = pneg %p130
      // Predicated region
      $region9: #{tpu_custom_call.1} parent=5 // pred_check
        _
      $region10: #{tpu_custom_call.1} parent=5 // pred_check_branch
        %133 = sbr.rel (%p130) target = $region12
      $region11: #{tpu_custom_call.1} parent=5 // pred_region
        %s134 = ssub.s32 %s12, 1
        // Predicated region
        $region13: #{tpu_custom_call.1} parent=11 // pred_check
          %p135 = pneg %p71
        $region14: #{tpu_custom_call.1} parent=11 // pred_check_branch
          %137 = sbr.rel (%p135) target = $region16
        $region15: #{tpu_custom_call.1} parent=11 // pred_region
          _
        $region16: #{tpu_custom_call.1} parent=11 // pred_fallthru
          _
        // Predicated region
        $region17: #{tpu_custom_call.1} parent=11 // pred_check
          %p138 = pneg %p92
        $region18: #{tpu_custom_call.1} parent=11 // pred_check_branch
          %140 = sbr.rel (%p138) target = $region20
        $region19: #{tpu_custom_call.1} parent=11 // pred_region
          _
        $region20: #{tpu_custom_call.1} parent=11 // pred_fallthru
          _
      $region12: #{tpu_custom_call.1} parent=5 // pred_fallthru
        _
      %p141 = scmp.lt.s32.totalorder %s12, 4
      // Predicated region
      $region21: #{tpu_custom_call.1} parent=5 // pred_check
        %p142 = pneg %p141
      $region22: #{tpu_custom_call.1} parent=5 // pred_check_branch
        %144 = sbr.rel (%p142) target = $region24
      $region23: #{tpu_custom_call.1} parent=5 // pred_region
        // Predicated region
        $region25: #{tpu_custom_call.1} parent=23 // pred_check
          %p145 = pneg %p44
        $region26: #{tpu_custom_call.1} parent=23 // pred_check_branch
          %147 = sbr.rel (%p145) target = $region28
        $region27: #{tpu_custom_call.1} parent=23 // pred_region
          %p148 = scmp.lt.s32.totalorder %s19, 1
          %s149 = scalar_select %p148, %s19, 1
          %s150 = smul.addr %s149, 54
          %s151 = smul.addr %s150, 8
          %s152 = scalar_lea.vmem %s0, %s151
        $region28: #{tpu_custom_call.1} parent=23 // pred_fallthru
          _
      $region24: #{tpu_custom_call.1} parent=5 // pred_fallthru
        _
      %p153 = scmp.le.s32.totalorder 1, %s12
      %p154 = scmp.lt.s32.totalorder %s12, 5
      %p155 = pnand %p153, %p154
      %p156 = pneg %p155
      // Predicated region
      $region29: #{tpu_custom_call.1} parent=5 // pred_check
        _
      $region30: #{tpu_custom_call.1} parent=5 // pred_check_branch
        %158 = sbr.rel (%p155) target = $region32
      $region31: #{tpu_custom_call.1} parent=5 // pred_region
        %s159 = ssub.s32 %s12, 1
        %p160 = scmp.lt.s32.totalorder %s21, 1
        %s161 = scalar_select %p160, %s21, 1
        %s162 = smul.addr %s161, 54
        %s163 = smul.addr %s162, 8
        %s164 = scalar_lea.vmem %s0, %s163
        %p165 = pneg %p50
        %p166 = pneg %p47
        %p167 = pneg %p71
        %p168 = pneg %p68
        %p169 = pneg %p92
        %p170 = pneg %p89
        %p171 = pneg %p120
        %p172 = pneg %p117
        %s173 = sand.u32 %s107, 1
        %s174 = scalar_lea.sflag [#allocation4], %s173
        %s175 = sand.u32 %s107, 1
        %s176 = smul.addr %s175, 128
        %s177 = scalar_lea.vmem [#allocation3], %s176
        %p178 = scmp.lt.s32.totalorder %s21, 1
        %s179 = scalar_select %p178, %s21, 1
        %s180 = smul.addr %s179, 54
        %s181 = smul.addr %s180, 8
        %s182 = scalar_lea.vmem %s0, %s181
        %s183 = smul.u32 8, %s22
        %s184 = smul.u32 %s22, 8
        %s185 = smul.u32 %s184, 24
        %s186 = scalar_lea.vmem %s182, %s185
        %v187 = vld [vmem:[%s186] sm:$0xff]
        %v188 = vld [vmem:[%s186 + $0x8] sm:$0xff]
        %v189 = vld [vmem:[%s186 + $0x18] sm:$0xff]
        %v190 = vld [vmem:[%s186 + $0x20] sm:$0xff]
        %v191 = vld [vmem:[%s186 + $0x30] sm:$0xff]
        %v192 = vld [vmem:[%s186 + $0x38] sm:$0xff]
        %v193 = vld [vmem:[%s186 + $0x48] sm:$0xff]
        %v194 = vld [vmem:[%s186 + $0x50] sm:$0xff]
        %v195 = vld [vmem:[%s186 + $0x60] sm:$0xff]
        %v196 = vld [vmem:[%s186 + $0x68] sm:$0xff]
        %v197 = vld [vmem:[%s186 + $0x78] sm:$0xff]
        %v198 = vld [vmem:[%s186 + $0x80] sm:$0xff]
        %v199 = vld [vmem:[%s186 + $0x90] sm:$0xff]
        %v200 = vld [vmem:[%s186 + $0x98] sm:$0xff]
        %v201 = vld [vmem:[%s186 + $0xa8] sm:$0xff]
        %v202 = vld [vmem:[%s186 + $0xb0] sm:$0xff]
        %vm203 = vcmask 31744
        %204 = vst.msk [vmem:[#allocation2] sm:$0xff] %vm203, %v187
        %205 = vst.msk [vmem:[#allocation2 + $0x8] sm:$0xff] %vm203, %v188
        %206 = vst.msk [vmem:[#allocation2 + $0x10] sm:$0xff] %vm203, %v189
        %207 = vst.msk [vmem:[#allocation2 + $0x18] sm:$0xff] %vm203, %v190
        %208 = vst.msk [vmem:[#allocation2 + $0x20] sm:$0xff] %vm203, %v191
        %209 = vst.msk [vmem:[#allocation2 + $0x28] sm:$0xff] %vm203, %v192
        %210 = vst.msk [vmem:[#allocation2 + $0x30] sm:$0xff] %vm203, %v193
        %211 = vst.msk [vmem:[#allocation2 + $0x38] sm:$0xff] %vm203, %v194
        %212 = vst.msk [vmem:[#allocation2 + $0x40] sm:$0xff] %vm203, %v195
        %213 = vst.msk [vmem:[#allocation2 + $0x48] sm:$0xff] %vm203, %v196
        %214 = vst.msk [vmem:[#allocation2 + $0x50] sm:$0xff] %vm203, %v197
        %215 = vst.msk [vmem:[#allocation2 + $0x58] sm:$0xff] %vm203, %v198
        %216 = vst.msk [vmem:[#allocation2 + $0x60] sm:$0xff] %vm203, %v199
        %217 = vst.msk [vmem:[#allocation2 + $0x68] sm:$0xff] %vm203, %v200
        %218 = vst.msk [vmem:[#allocation2 + $0x70] sm:$0xff] %vm203, %v201
        %219 = vst.msk [vmem:[#allocation2 + $0x78] sm:$0xff] %vm203, %v202
        %v220 = vld [vmem:[%s186 + $0x1] sm:$0xff]
        %v221 = vld [vmem:[%s186 + $0x9] sm:$0xff]
        %v222 = vld [vmem:[%s186 + $0x19] sm:$0xff]
        %v223 = vld [vmem:[%s186 + $0x21] sm:$0xff]
        %v224 = vld [vmem:[%s186 + $0x31] sm:$0xff]
        %v225 = vld [vmem:[%s186 + $0x39] sm:$0xff]
        %v226 = vld [vmem:[%s186 + $0x49] sm:$0xff]
        %v227 = vld [vmem:[%s186 + $0x51] sm:$0xff]
        %v228 = vld [vmem:[%s186 + $0x61] sm:$0xff]
        %v229 = vld [vmem:[%s186 + $0x69] sm:$0xff]
        %v230 = vld [vmem:[%s186 + $0x79] sm:$0xff]
        %v231 = vld [vmem:[%s186 + $0x81] sm:$0xff]
        %v232 = vld [vmem:[%s186 + $0x91] sm:$0xff]
        %v233 = vld [vmem:[%s186 + $0x99] sm:$0xff]
        %v234 = vld [vmem:[%s186 + $0xa9] sm:$0xff]
        %v235 = vld [vmem:[%s186 + $0xb1] sm:$0xff]
        %252 = vrot.lane.b32.xlu0 %v220, 4
        %v253 = vpop.permute.xlu0 %252
        %254 = vrot.lane.b32.xlu0 %v221, 4
        %v255 = vpop.permute.xlu0 %254
        %256 = vrot.lane.b32.xlu0 %v222, 4
        %v257 = vpop.permute.xlu0 %256
        %258 = vrot.lane.b32.xlu0 %v223, 4
        %v259 = vpop.permute.xlu0 %258
        %260 = vrot.lane.b32.xlu0 %v224, 4
        %v261 = vpop.permute.xlu0 %260
        %262 = vrot.lane.b32.xlu0 %v225, 4
        %v263 = vpop.permute.xlu0 %262
        %264 = vrot.lane.b32.xlu0 %v226, 4
        %v265 = vpop.permute.xlu0 %264
        %266 = vrot.lane.b32.xlu0 %v227, 4
        %v267 = vpop.permute.xlu0 %266
        %268 = vrot.lane.b32.xlu0 %v228, 4
        %v269 = vpop.permute.xlu0 %268
        %270 = vrot.lane.b32.xlu0 %v229, 4
        %v271 = vpop.permute.xlu0 %270
        %272 = vrot.lane.b32.xlu0 %v230, 4
        %v273 = vpop.permute.xlu0 %272
        %274 = vrot.lane.b32.xlu0 %v231, 4
        %v275 = vpop.permute.xlu0 %274
        %276 = vrot.lane.b32.xlu0 %v232, 4
        %v277 = vpop.permute.xlu0 %276
        %278 = vrot.lane.b32.xlu0 %v233, 4
        %v279 = vpop.permute.xlu0 %278
        %280 = vrot.lane.b32.xlu0 %v234, 4
        %v281 = vpop.permute.xlu0 %280
        %282 = vrot.lane.b32.xlu0 %v235, 4
        %v283 = vpop.permute.xlu0 %282
        %vm300 = vcmask 64544
        %301 = vst.msk [vmem:[#allocation2] sm:$0xff] %vm300, %v253
        %302 = vst.msk [vmem:[#allocation2 + $0x8] sm:$0xff] %vm300, %v255
        %303 = vst.msk [vmem:[#allocation2 + $0x10] sm:$0xff] %vm300, %v257
        %304 = vst.msk [vmem:[#allocation2 + $0x18] sm:$0xff] %vm300, %v259
        %305 = vst.msk [vmem:[#allocation2 + $0x20] sm:$0xff] %vm300, %v261
        %306 = vst.msk [vmem:[#allocation2 + $0x28] sm:$0xff] %vm300, %v263
        %307 = vst.msk [vmem:[#allocation2 + $0x30] sm:$0xff] %vm300, %v265
        %308 = vst.msk [vmem:[#allocation2 + $0x38] sm:$0xff] %vm300, %v267
        %309 = vst.msk [vmem:[#allocation2 + $0x40] sm:$0xff] %vm300, %v269
        %310 = vst.msk [vmem:[#allocation2 + $0x48] sm:$0xff] %vm300, %v271
        %311 = vst.msk [vmem:[#allocation2 + $0x50] sm:$0xff] %vm300, %v273
        %312 = vst.msk [vmem:[#allocation2 + $0x58] sm:$0xff] %vm300, %v275
        %313 = vst.msk [vmem:[#allocation2 + $0x60] sm:$0xff] %vm300, %v277
        %314 = vst.msk [vmem:[#allocation2 + $0x68] sm:$0xff] %vm300, %v279
        %315 = vst.msk [vmem:[#allocation2 + $0x70] sm:$0xff] %vm300, %v281
        %316 = vst.msk [vmem:[#allocation2 + $0x78] sm:$0xff] %vm300, %v283
        %v317 = vld [vmem:[%s186 + $0x2] sm:$0xff]
        %v318 = vld [vmem:[%s186 + $0xa] sm:$0xff]
        %v319 = vld [vmem:[%s186 + $0x1a] sm:$0xff]
        %v320 = vld [vmem:[%s186 + $0x22] sm:$0xff]
        %v321 = vld [vmem:[%s186 + $0x32] sm:$0xff]
        %v322 = vld [vmem:[%s186 + $0x3a] sm:$0xff]
        %v323 = vld [vmem:[%s186 + $0x4a] sm:$0xff]
        %v324 = vld [vmem:[%s186 + $0x52] sm:$0xff]
        %v325 = vld [vmem:[%s186 + $0x62] sm:$0xff]
        %v326 = vld [vmem:[%s186 + $0x6a] sm:$0xff]
        %v327 = vld [vmem:[%s186 + $0x7a] sm:$0xff]
        %v328 = vld [vmem:[%s186 + $0x82] sm:$0xff]
        %v329 = vld [vmem:[%s186 + $0x92] sm:$0xff]
        %v330 = vld [vmem:[%s186 + $0x9a] sm:$0xff]
        %v331 = vld [vmem:[%s186 + $0xaa] sm:$0xff]
        %v332 = vld [vmem:[%s186 + $0xb2] sm:$0xff]
        %349 = vrot.lane.b32.xlu0 %v317, 8
        %v350 = vpop.permute.xlu0 %349
        %351 = vrot.lane.b32.xlu0 %v318, 8
        %v352 = vpop.permute.xlu0 %351
        %353 = vrot.lane.b32.xlu0 %v319, 8
        %v354 = vpop.permute.xlu0 %353
        %355 = vrot.lane.b32.xlu0 %v320, 8
        %v356 = vpop.permute.xlu0 %355
        %357 = vrot.lane.b32.xlu0 %v321, 8
        %v358 = vpop.permute.xlu0 %357
        %359 = vrot.lane.b32.xlu0 %v322, 8
        %v360 = vpop.permute.xlu0 %359
        %361 = vrot.lane.b32.xlu0 %v323, 8
        %v362 = vpop.permute.xlu0 %361
        %363 = vrot.lane.b32.xlu0 %v324, 8
        %v364 = vpop.permute.xlu0 %363
        %365 = vrot.lane.b32.xlu0 %v325, 8
        %v366 = vpop.permute.xlu0 %365
        %367 = vrot.lane.b32.xlu0 %v326, 8
        %v368 = vpop.permute.xlu0 %367
        %369 = vrot.lane.b32.xlu0 %v327, 8
        %v370 = vpop.permute.xlu0 %369
        %371 = vrot.lane.b32.xlu0 %v328, 8
        %v372 = vpop.permute.xlu0 %371
        %373 = vrot.lane.b32.xlu0 %v329, 8
        %v374 = vpop.permute.xlu0 %373
        %375 = vrot.lane.b32.xlu0 %v330, 8
        %v376 = vpop.permute.xlu0 %375
        %377 = vrot.lane.b32.xlu0 %v331, 8
        %v378 = vpop.permute.xlu0 %377
        %379 = vrot.lane.b32.xlu0 %v332, 8
        %v380 = vpop.permute.xlu0 %379
        %vm397 = vcmask 97344
        %398 = vst.msk [vmem:[#allocation2] sm:$0xff] %vm397, %v350
        %399 = vst.msk [vmem:[#allocation2 + $0x8] sm:$0xff] %vm397, %v352
        %400 = vst.msk [vmem:[#allocation2 + $0x10] sm:$0xff] %vm397, %v354
        %401 = vst.msk [vmem:[#allocation2 + $0x18] sm:$0xff] %vm397, %v356
        %402 = vst.msk [vmem:[#allocation2 + $0x20] sm:$0xff] %vm397, %v358
        %403 = vst.msk [vmem:[#allocation2 + $0x28] sm:$0xff] %vm397, %v360
        %404 = vst.msk [vmem:[#allocation2 + $0x30] sm:$0xff] %vm397, %v362
        %405 = vst.msk [vmem:[#allocation2 + $0x38] sm:$0xff] %vm397, %v364
        %406 = vst.msk [vmem:[#allocation2 + $0x40] sm:$0xff] %vm397, %v366
        %407 = vst.msk [vmem:[#allocation2 + $0x48] sm:$0xff] %vm397, %v368
        %408 = vst.msk [vmem:[#allocation2 + $0x50] sm:$0xff] %vm397, %v370
        %409 = vst.msk [vmem:[#allocation2 + $0x58] sm:$0xff] %vm397, %v372
        %410 = vst.msk [vmem:[#allocation2 + $0x60] sm:$0xff] %vm397, %v374
        %411 = vst.msk [vmem:[#allocation2 + $0x68] sm:$0xff] %vm397, %v376
        %412 = vst.msk [vmem:[#allocation2 + $0x70] sm:$0xff] %vm397, %v378
        %413 = vst.msk [vmem:[#allocation2 + $0x78] sm:$0xff] %vm397, %v380
        %s414 = sadd.s32 %s184, 1
        %s415 = smul.u32 %s414, 24
        %s416 = scalar_lea.vmem %s182, %s415
        %v417 = vld [vmem:[%s416] sm:$0xff]
        %v418 = vld [vmem:[%s416 + $0x8] sm:$0xff]
        %v419 = vld [vmem:[%s416 + $0x18] sm:$0xff]
        %v420 = vld [vmem:[%s416 + $0x20] sm:$0xff]
        %v421 = vld [vmem:[%s416 + $0x30] sm:$0xff]
        %v422 = vld [vmem:[%s416 + $0x38] sm:$0xff]
        %v423 = vld [vmem:[%s416 + $0x48] sm:$0xff]
        %v424 = vld [vmem:[%s416 + $0x50] sm:$0xff]
        %v425 = vld [vmem:[%s416 + $0x60] sm:$0xff]
        %v426 = vld [vmem:[%s416 + $0x68] sm:$0xff]
        %v427 = vld [vmem:[%s416 + $0x78] sm:$0xff]
        %v428 = vld [vmem:[%s416 + $0x80] sm:$0xff]
        %v429 = vld [vmem:[%s416 + $0x90] sm:$0xff]
        %v430 = vld [vmem:[%s416 + $0x98] sm:$0xff]
        %v431 = vld [vmem:[%s416 + $0xa8] sm:$0xff]
        %v432 = vld [vmem:[%s416 + $0xb0] sm:$0xff]
        %449 = vrot.lane.b32.xlu0 %v417, 12
        %v450 = vpop.permute.xlu0 %449
        %451 = vrot.lane.b32.xlu0 %v418, 12
        %v452 = vpop.permute.xlu0 %451
        %453 = vrot.lane.b32.xlu0 %v419, 12
        %v454 = vpop.permute.xlu0 %453
        %455 = vrot.lane.b32.xlu0 %v420, 12
        %v456 = vpop.permute.xlu0 %455
        %457 = vrot.lane.b32.xlu0 %v421, 12
        %v458 = vpop.permute.xlu0 %457
        %459 = vrot.lane.b32.xlu0 %v422, 12
        %v460 = vpop.permute.xlu0 %459
        %461 = vrot.lane.b32.xlu0 %v423, 12
        %v462 = vpop.permute.xlu0 %461
        %463 = vrot.lane.b32.xlu0 %v424, 12
        %v464 = vpop.permute.xlu0 %463
        %465 = vrot.lane.b32.xlu0 %v425, 12
        %v466 = vpop.permute.xlu0 %465
        %467 = vrot.lane.b32.xlu0 %v426, 12
        %v468 = vpop.permute.xlu0 %467
        %469 = vrot.lane.b32.xlu0 %v427, 12
        %v470 = vpop.permute.xlu0 %469
        %471 = vrot.lane.b32.xlu0 %v428, 12
        %v472 = vpop.permute.xlu0 %471
        %473 = vrot.lane.b32.xlu0 %v429, 12
        %v474 = vpop.permute.xlu0 %473
        %475 = vrot.lane.b32.xlu0 %v430, 12
        %v476 = vpop.permute.xlu0 %475
        %477 = vrot.lane.b32.xlu0 %v431, 12
        %v478 = vpop.permute.xlu0 %477
        %479 = vrot.lane.b32.xlu0 %v432, 12
        %v480 = vpop.permute.xlu0 %479
        %vm497 = vcmask 130144
        %498 = vst.msk [vmem:[#allocation2] sm:$0xff] %vm497, %v450
        %499 = vst.msk [vmem:[#allocation2 + $0x8] sm:$0xff] %vm497, %v452
        %500 = vst.msk [vmem:[#allocation2 + $0x10] sm:$0xff] %vm497, %v454
        %501 = vst.msk [vmem:[#allocation2 + $0x18] sm:$0xff] %vm497, %v456
        %502 = vst.msk [vmem:[#allocation2 + $0x20] sm:$0xff] %vm497, %v458
        %503 = vst.msk [vmem:[#allocation2 + $0x28] sm:$0xff] %vm497, %v460
        %504 = vst.msk [vmem:[#allocation2 + $0x30] sm:$0xff] %vm497, %v462
        %505 = vst.msk [vmem:[#allocation2 + $0x38] sm:$0xff] %vm497, %v464
        %506 = vst.msk [vmem:[#allocation2 + $0x40] sm:$0xff] %vm497, %v466
        %507 = vst.msk [vmem:[#allocation2 + $0x48] sm:$0xff] %vm497, %v468
        %508 = vst.msk [vmem:[#allocation2 + $0x50] sm:$0xff] %vm497, %v470
        %509 = vst.msk [vmem:[#allocation2 + $0x58] sm:$0xff] %vm497, %v472
        %510 = vst.msk [vmem:[#allocation2 + $0x60] sm:$0xff] %vm497, %v474
        %511 = vst.msk [vmem:[#allocation2 + $0x68] sm:$0xff] %vm497, %v476
        %512 = vst.msk [vmem:[#allocation2 + $0x70] sm:$0xff] %vm497, %v478
        %513 = vst.msk [vmem:[#allocation2 + $0x78] sm:$0xff] %vm497, %v480
        %v514 = vld [vmem:[%s416 + $0x1] sm:$0xff]
        %v515 = vld [vmem:[%s416 + $0x9] sm:$0xff]
        %v516 = vld [vmem:[%s416 + $0x19] sm:$0xff]
        %v517 = vld [vmem:[%s416 + $0x21] sm:$0xff]
        %v518 = vld [vmem:[%s416 + $0x31] sm:$0xff]
        %v519 = vld [vmem:[%s416 + $0x39] sm:$0xff]
        %v520 = vld [vmem:[%s416 + $0x49] sm:$0xff]
        %v521 = vld [vmem:[%s416 + $0x51] sm:$0xff]
        %v522 = vld [vmem:[%s416 + $0x61] sm:$0xff]
        %v523 = vld [vmem:[%s416 + $0x69] sm:$0xff]
        %v524 = vld [vmem:[%s416 + $0x79] sm:$0xff]
        %v525 = vld [vmem:[%s416 + $0x81] sm:$0xff]
        %v526 = vld [vmem:[%s416 + $0x91] sm:$0xff]
        %v527 = vld [vmem:[%s416 + $0x99] sm:$0xff]
        %v528 = vld [vmem:[%s416 + $0xa9] sm:$0xff]
        %v529 = vld [vmem:[%s416 + $0xb1] sm:$0xff]
        %546 = vrot.lane.b32.xlu0 %v514, 16
        %v547 = vpop.permute.xlu0 %546
        %548 = vrot.lane.b32.xlu0 %v515, 16
        %v549 = vpop.permute.xlu0 %548
        %550 = vrot.lane.b32.xlu0 %v516, 16
        %v551 = vpop.permute.xlu0 %550
        %552 = vrot.lane.b32.xlu0 %v517, 16
        %v553 = vpop.permute.xlu0 %552
        %554 = vrot.lane.b32.xlu0 %v518, 16
        %v555 = vpop.permute.xlu0 %554
        %556 = vrot.lane.b32.xlu0 %v519, 16
        %v557 = vpop.permute.xlu0 %556
        %558 = vrot.lane.b32.xlu0 %v520, 16
        %v559 = vpop.permute.xlu0 %558
        %560 = vrot.lane.b32.xlu0 %v521, 16
        %v561 = vpop.permute.xlu0 %560
        %562 = vrot.lane.b32.xlu0 %v522, 16
        %v563 = vpop.permute.xlu0 %562
        %564 = vrot.lane.b32.xlu0 %v523, 16
        %v565 = vpop.permute.xlu0 %564
        %566 = vrot.lane.b32.xlu0 %v524, 16
        %v567 = vpop.permute.xlu0 %566
        %568 = vrot.lane.b32.xlu0 %v525, 16
        %v569 = vpop.permute.xlu0 %568
        %570 = vrot.lane.b32.xlu0 %v526, 16
        %v571 = vpop.permute.xlu0 %570
        %572 = vrot.lane.b32.xlu0 %v527, 16
        %v573 = vpop.permute.xlu0 %572
        %574 = vrot.lane.b32.xlu0 %v528, 16
        %v575 = vpop.permute.xlu0 %574
        %576 = vrot.lane.b32.xlu0 %v529, 16
        %v577 = vpop.permute.xlu0 %576
        %vm594 = vcmask 162944
        %595 = vst.msk [vmem:[#allocation2] sm:$0xff] %vm594, %v547
        %596 = vst.msk [vmem:[#allocation2 + $0x8] sm:$0xff] %vm594, %v549
        %597 = vst.msk [vmem:[#allocation2 + $0x10] sm:$0xff] %vm594, %v551
        %598 = vst.msk [vmem:[#allocation2 + $0x18] sm:$0xff] %vm594, %v553
        %599 = vst.msk [vmem:[#allocation2 + $0x20] sm:$0xff] %vm594, %v555
        %600 = vst.msk [vmem:[#allocation2 + $0x28] sm:$0xff] %vm594, %v557
        %601 = vst.msk [vmem:[#allocation2 + $0x30] sm:$0xff] %vm594, %v559
        %602 = vst.msk [vmem:[#allocation2 + $0x38] sm:$0xff] %vm594, %v561
        %603 = vst.msk [vmem:[#allocation2 + $0x40] sm:$0xff] %vm594, %v563
        %604 = vst.msk [vmem:[#allocation2 + $0x48] sm:$0xff] %vm594, %v565
        %605 = vst.msk [vmem:[#allocation2 + $0x50] sm:$0xff] %vm594, %v567
        %606 = vst.msk [vmem:[#allocation2 + $0x58] sm:$0xff] %vm594, %v569
        %607 = vst.msk [vmem:[#allocation2 + $0x60] sm:$0xff] %vm594, %v571
        %608 = vst.msk [vmem:[#allocation2 + $0x68] sm:$0xff] %vm594, %v573
        %609 = vst.msk [vmem:[#allocation2 + $0x70] sm:$0xff] %vm594, %v575
        %610 = vst.msk [vmem:[#allocation2 + $0x78] sm:$0xff] %vm594, %v577
        %v611 = vld [vmem:[%s416 + $0x2] sm:$0xff]
        %v612 = vld [vmem:[%s416 + $0xa] sm:$0xff]
        %v613 = vld [vmem:[%s416 + $0x1a] sm:$0xff]
        %v614 = vld [vmem:[%s416 + $0x22] sm:$0xff]
        %v615 = vld [vmem:[%s416 + $0x32] sm:$0xff]
        %v616 = vld [vmem:[%s416 + $0x3a] sm:$0xff]
        %v617 = vld [vmem:[%s416 + $0x4a] sm:$0xff]
        %v618 = vld [vmem:[%s416 + $0x52] sm:$0xff]
        %v619 = vld [vmem:[%s416 + $0x62] sm:$0xff]
        %v620 = vld [vmem:[%s416 + $0x6a] sm:$0xff]
        %v621 = vld [vmem:[%s416 + $0x7a] sm:$0xff]
        %v622 = vld [vmem:[%s416 + $0x82] sm:$0xff]
        %v623 = vld [vmem:[%s416 + $0x92] sm:$0xff]
        %v624 = vld [vmem:[%s416 + $0x9a] sm:$0xff]
        %v625 = vld [vmem:[%s416 + $0xaa] sm:$0xff]
        %v626 = vld [vmem:[%s416 + $0xb2] sm:$0xff]
        %643 = vrot.lane.b32.xlu0 %v611, 20
        %v644 = vpop.permute.xlu0 %643
        %645 = vrot.lane.b32.xlu0 %v612, 20
        %v646 = vpop.permute.xlu0 %645
        %647 = vrot.lane.b32.xlu0 %v613, 20
        %v648 = vpop.permute.xlu0 %647
        %649 = vrot.lane.b32.xlu0 %v614, 20
        %v650 = vpop.permute.xlu0 %649
        %651 = vrot.lane.b32.xlu0 %v615, 20
        %v652 = vpop.permute.xlu0 %651
        %653 = vrot.lane.b32.xlu0 %v616, 20
        %v654 = vpop.permute.xlu0 %653
        %655 = vrot.lane.b32.xlu0 %v617, 20
        %v656 = vpop.permute.xlu0 %655
        %657 = vrot.lane.b32.xlu0 %v618, 20
        %v658 = vpop.permute.xlu0 %657
        %659 = vrot.lane.b32.xlu0 %v619, 20
        %v660 = vpop.permute.xlu0 %659
        %661 = vrot.lane.b32.xlu0 %v620, 20
        %v662 = vpop.permute.xlu0 %661
        %663 = vrot.lane.b32.xlu0 %v621, 20
        %v664 = vpop.permute.xlu0 %663
        %665 = vrot.lane.b32.xlu0 %v622, 20
        %v666 = vpop.permute.xlu0 %665
        %667 = vrot.lane.b32.xlu0 %v623, 20
        %v668 = vpop.permute.xlu0 %667
        %669 = vrot.lane.b32.xlu0 %v624, 20
        %v670 = vpop.permute.xlu0 %669
        %671 = vrot.lane.b32.xlu0 %v625, 20
        %v672 = vpop.permute.xlu0 %671
        %673 = vrot.lane.b32.xlu0 %v626, 20
        %v674 = vpop.permute.xlu0 %673
        %vm691 = vcmask 195744
        %692 = vst.msk [vmem:[#allocation2] sm:$0xff] %vm691, %v644
        %693 = vst.msk [vmem:[#allocation2 + $0x8] sm:$0xff] %vm691, %v646
        %694 = vst.msk [vmem:[#allocation2 + $0x10] sm:$0xff] %vm691, %v648
        %695 = vst.msk [vmem:[#allocation2 + $0x18] sm:$0xff] %vm691, %v650
        %696 = vst.msk [vmem:[#allocation2 + $0x20] sm:$0xff] %vm691, %v652
        %697 = vst.msk [vmem:[#allocation2 + $0x28] sm:$0xff] %vm691, %v654
        %698 = vst.msk [vmem:[#allocation2 + $0x30] sm:$0xff] %vm691, %v656
        %699 = vst.msk [vmem:[#allocation2 + $0x38] sm:$0xff] %vm691, %v658
        %700 = vst.msk [vmem:[#allocation2 + $0x40] sm:$0xff] %vm691, %v660
        %701 = vst.msk [vmem:[#allocation2 + $0x48] sm:$0xff] %vm691, %v662
        %702 = vst.msk [vmem:[#allocation2 + $0x50] sm:$0xff] %vm691, %v664
        %703 = vst.msk [vmem:[#allocation2 + $0x58] sm:$0xff] %vm691, %v666
        %704 = vst.msk [vmem:[#allocation2 + $0x60] sm:$0xff] %vm691, %v668
        %705 = vst.msk [vmem:[#allocation2 + $0x68] sm:$0xff] %vm691, %v670
        %706 = vst.msk [vmem:[#allocation2 + $0x70] sm:$0xff] %vm691, %v672
        %707 = vst.msk [vmem:[#allocation2 + $0x78] sm:$0xff] %vm691, %v674
        %s708 = sadd.s32 %s184, 2
        %s709 = smul.u32 %s708, 24
        %s710 = scalar_lea.vmem %s182, %s709
        %v711 = vld [vmem:[%s710] sm:$0xff]
        %v712 = vld [vmem:[%s710 + $0x8] sm:$0xff]
        %v713 = vld [vmem:[%s710 + $0x18] sm:$0xff]
        %v714 = vld [vmem:[%s710 + $0x20] sm:$0xff]
        %v715 = vld [vmem:[%s710 + $0x30] sm:$0xff]
        %v716 = vld [vmem:[%s710 + $0x38] sm:$0xff]
        %v717 = vld [vmem:[%s710 + $0x48] sm:$0xff]
        %v718 = vld [vmem:[%s710 + $0x50] sm:$0xff]
        %v719 = vld [vmem:[%s710 + $0x60] sm:$0xff]
        %v720 = vld [vmem:[%s710 + $0x68] sm:$0xff]
        %v721 = vld [vmem:[%s710 + $0x78] sm:$0xff]
        %v722 = vld [vmem:[%s710 + $0x80] sm:$0xff]
        %v723 = vld [vmem:[%s710 + $0x90] sm:$0xff]
        %v724 = vld [vmem:[%s710 + $0x98] sm:$0xff]
        %v725 = vld [vmem:[%s710 + $0xa8] sm:$0xff]
        %v726 = vld [vmem:[%s710 + $0xb0] sm:$0xff]
        %743 = vrot.lane.b32.xlu0 %v711, 24
        %v744 = vpop.permute.xlu0 %743
        %745 = vrot.lane.b32.xlu0 %v712, 24
        %v746 = vpop.permute.xlu0 %745
        %747 = vrot.lane.b32.xlu0 %v713, 24
        %v748 = vpop.permute.xlu0 %747
        %749 = vrot.lane.b32.xlu0 %v714, 24
        %v750 = vpop.permute.xlu0 %749
        %751 = vrot.lane.b32.xlu0 %v715, 24
        %v752 = vpop.permute.xlu0 %751
        %753 = vrot.lane.b32.xlu0 %v716, 24
        %v754 = vpop.permute.xlu0 %753
        %755 = vrot.lane.b32.xlu0 %v717, 24
        %v756 = vpop.permute.xlu0 %755
        %757 = vrot.lane.b32.xlu0 %v718, 24
        %v758 = vpop.permute.xlu0 %757
        %759 = vrot.lane.b32.xlu0 %v719, 24
        %v760 = vpop.permute.xlu0 %759
        %761 = vrot.lane.b32.xlu0 %v720, 24
        %v762 = vpop.permute.xlu0 %761
        %763 = vrot.lane.b32.xlu0 %v721, 24
        %v764 = vpop.permute.xlu0 %763
        %765 = vrot.lane.b32.xlu0 %v722, 24
        %v766 = vpop.permute.xlu0 %765
        %767 = vrot.lane.b32.xlu0 %v723, 24
        %v768 = vpop.permute.xlu0 %767
        %769 = vrot.lane.b32.xlu0 %v724, 24
        %v770 = vpop.permute.xlu0 %769
        %771 = vrot.lane.b32.xlu0 %v725, 24
        %v772 = vpop.permute.xlu0 %771
        %773 = vrot.lane.b32.xlu0 %v726, 24
        %v774 = vpop.permute.xlu0 %773
        %vm791 = vcmask 228544
        %792 = vst.msk [vmem:[#allocation2] sm:$0xff] %vm791, %v744
        %793 = vst.msk [vmem:[#allocation2 + $0x8] sm:$0xff] %vm791, %v746
        %794 = vst.msk [vmem:[#allocation2 + $0x10] sm:$0xff] %vm791, %v748
        %795 = vst.msk [vmem:[#allocation2 + $0x18] sm:$0xff] %vm791, %v750
        %796 = vst.msk [vmem:[#allocation2 + $0x20] sm:$0xff] %vm791, %v752
        %797 = vst.msk [vmem:[#allocation2 + $0x28] sm:$0xff] %vm791, %v754
        %798 = vst.msk [vmem:[#allocation2 + $0x30] sm:$0xff] %vm791, %v756
        %799 = vst.msk [vmem:[#allocation2 + $0x38] sm:$0xff] %vm791, %v758
        %800 = vst.msk [vmem:[#allocation2 + $0x40] sm:$0xff] %vm791, %v760
        %801 = vst.msk [vmem:[#allocation2 + $0x48] sm:$0xff] %vm791, %v762
        %802 = vst.msk [vmem:[#allocation2 + $0x50] sm:$0xff] %vm791, %v764
        %803 = vst.msk [vmem:[#allocation2 + $0x58] sm:$0xff] %vm791, %v766
        %804 = vst.msk [vmem:[#allocation2 + $0x60] sm:$0xff] %vm791, %v768
        %805 = vst.msk [vmem:[#allocation2 + $0x68] sm:$0xff] %vm791, %v770
        %806 = vst.msk [vmem:[#allocation2 + $0x70] sm:$0xff] %vm791, %v772
        %807 = vst.msk [vmem:[#allocation2 + $0x78] sm:$0xff] %vm791, %v774
        %v808 = vld [vmem:[%s710 + $0x1] sm:$0xff]
        %v809 = vld [vmem:[%s710 + $0x9] sm:$0xff]
        %v810 = vld [vmem:[%s710 + $0x19] sm:$0xff]
        %v811 = vld [vmem:[%s710 + $0x21] sm:$0xff]
        %v812 = vld [vmem:[%s710 + $0x31] sm:$0xff]
        %v813 = vld [vmem:[%s710 + $0x39] sm:$0xff]
        %v814 = vld [vmem:[%s710 + $0x49] sm:$0xff]
        %v815 = vld [vmem:[%s710 + $0x51] sm:$0xff]
        %v816 = vld [vmem:[%s710 + $0x61] sm:$0xff]
        %v817 = vld [vmem:[%s710 + $0x69] sm:$0xff]
        %v818 = vld [vmem:[%s710 + $0x79] sm:$0xff]
        %v819 = vld [vmem:[%s710 + $0x81] sm:$0xff]
        %v820 = vld [vmem:[%s710 + $0x91] sm:$0xff]
        %v821 = vld [vmem:[%s710 + $0x99] sm:$0xff]
        %v822 = vld [vmem:[%s710 + $0xa9] sm:$0xff]
        %v823 = vld [vmem:[%s710 + $0xb1] sm:$0xff]
        %840 = vrot.lane.b32.xlu0 %v808, 28
        %v841 = vpop.permute.xlu0 %840
        %842 = vrot.lane.b32.xlu0 %v809, 28
        %v843 = vpop.permute.xlu0 %842
        %844 = vrot.lane.b32.xlu0 %v810, 28
        %v845 = vpop.permute.xlu0 %844
        %846 = vrot.lane.b32.xlu0 %v811, 28
        %v847 = vpop.permute.xlu0 %846
        %848 = vrot.lane.b32.xlu0 %v812, 28
        %v849 = vpop.permute.xlu0 %848
        %850 = vrot.lane.b32.xlu0 %v813, 28
        %v851 = vpop.permute.xlu0 %850
        %852 = vrot.lane.b32.xlu0 %v814, 28
        %v853 = vpop.permute.xlu0 %852
        %854 = vrot.lane.b32.xlu0 %v815, 28
        %v855 = vpop.permute.xlu0 %854
        %856 = vrot.lane.b32.xlu0 %v816, 28
        %v857 = vpop.permute.xlu0 %856
        %858 = vrot.lane.b32.xlu0 %v817, 28
        %v859 = vpop.permute.xlu0 %858
        %860 = vrot.lane.b32.xlu0 %v818, 28
        %v861 = vpop.permute.xlu0 %860
        %862 = vrot.lane.b32.xlu0 %v819, 28
        %v863 = vpop.permute.xlu0 %862
        %864 = vrot.lane.b32.xlu0 %v820, 28
        %v865 = vpop.permute.xlu0 %864
        %866 = vrot.lane.b32.xlu0 %v821, 28
        %v867 = vpop.permute.xlu0 %866
        %868 = vrot.lane.b32.xlu0 %v822, 28
        %v869 = vpop.permute.xlu0 %868
        %870 = vrot.lane.b32.xlu0 %v823, 28
        %v871 = vpop.permute.xlu0 %870
        %vm888 = vcmask 261344
        %889 = vst.msk [vmem:[#allocation2] sm:$0xff] %vm888, %v841
        %890 = vst.msk [vmem:[#allocation2 + $0x8] sm:$0xff] %vm888, %v843
        %891 = vst.msk [vmem:[#allocation2 + $0x10] sm:$0xff] %vm888, %v845
        %892 = vst.msk [vmem:[#allocation2 + $0x18] sm:$0xff] %vm888, %v847
        %893 = vst.msk [vmem:[#allocation2 + $0x20] sm:$0xff] %vm888, %v849
        %894 = vst.msk [vmem:[#allocation2 + $0x28] sm:$0xff] %vm888, %v851
        %895 = vst.msk [vmem:[#allocation2 + $0x30] sm:$0xff] %vm888, %v853
        %896 = vst.msk [vmem:[#allocation2 + $0x38] sm:$0xff] %vm888, %v855
        %897 = vst.msk [vmem:[#allocation2 + $0x40] sm:$0xff] %vm888, %v857
        %898 = vst.msk [vmem:[#allocation2 + $0x48] sm:$0xff] %vm888, %v859
        %899 = vst.msk [vmem:[#allocation2 + $0x50] sm:$0xff] %vm888, %v861
        %900 = vst.msk [vmem:[#allocation2 + $0x58] sm:$0xff] %vm888, %v863
        %901 = vst.msk [vmem:[#allocation2 + $0x60] sm:$0xff] %vm888, %v865
        %902 = vst.msk [vmem:[#allocation2 + $0x68] sm:$0xff] %vm888, %v867
        %903 = vst.msk [vmem:[#allocation2 + $0x70] sm:$0xff] %vm888, %v869
        %904 = vst.msk [vmem:[#allocation2 + $0x78] sm:$0xff] %vm888, %v871
        %v905 = vld [vmem:[%s710 + $0x2] sm:$0xff]
        %v906 = vld [vmem:[%s710 + $0xa] sm:$0xff]
        %v907 = vld [vmem:[%s710 + $0x1a] sm:$0xff]
        %v908 = vld [vmem:[%s710 + $0x22] sm:$0xff]
        %v909 = vld [vmem:[%s710 + $0x32] sm:$0xff]
        %v910 = vld [vmem:[%s710 + $0x3a] sm:$0xff]
        %v911 = vld [vmem:[%s710 + $0x4a] sm:$0xff]
        %v912 = vld [vmem:[%s710 + $0x52] sm:$0xff]
        %v913 = vld [vmem:[%s710 + $0x62] sm:$0xff]
        %v914 = vld [vmem:[%s710 + $0x6a] sm:$0xff]
        %v915 = vld [vmem:[%s710 + $0x7a] sm:$0xff]
        %v916 = vld [vmem:[%s710 + $0x82] sm:$0xff]
        %v917 = vld [vmem:[%s710 + $0x92] sm:$0xff]
        %v918 = vld [vmem:[%s710 + $0x9a] sm:$0xff]
        %v919 = vld [vmem:[%s710 + $0xaa] sm:$0xff]
        %v920 = vld [vmem:[%s710 + $0xb2] sm:$0xff]
        %937 = vrot.lane.b32.xlu0 %v905, 32
        %v938 = vpop.permute.xlu0 %937
        %939 = vrot.lane.b32.xlu0 %v906, 32
        %v940 = vpop.permute.xlu0 %939
        %941 = vrot.lane.b32.xlu0 %v907, 32
        %v942 = vpop.permute.xlu0 %941
        %943 = vrot.lane.b32.xlu0 %v908, 32
        %v944 = vpop.permute.xlu0 %943
        %945 = vrot.lane.b32.xlu0 %v909, 32
        %v946 = vpop.permute.xlu0 %945
        %947 = vrot.lane.b32.xlu0 %v910, 32
        %v948 = vpop.permute.xlu0 %947
        %949 = vrot.lane.b32.xlu0 %v911, 32
        %v950 = vpop.permute.xlu0 %949
        %951 = vrot.lane.b32.xlu0 %v912, 32
        %v952 = vpop.permute.xlu0 %951
        %953 = vrot.lane.b32.xlu0 %v913, 32
        %v954 = vpop.permute.xlu0 %953
        %955 = vrot.lane.b32.xlu0 %v914, 32
        %v956 = vpop.permute.xlu0 %955
        %957 = vrot.lane.b32.xlu0 %v915, 32
        %v958 = vpop.permute.xlu0 %957
        %959 = vrot.lane.b32.xlu0 %v916, 32
        %v960 = vpop.permute.xlu0 %959
        %961 = vrot.lane.b32.xlu0 %v917, 32
        %v962 = vpop.permute.xlu0 %961
        %963 = vrot.lane.b32.xlu0 %v918, 32
        %v964 = vpop.permute.xlu0 %963
        %965 = vrot.lane.b32.xlu0 %v919, 32
        %v966 = vpop.permute.xlu0 %965
        %967 = vrot.lane.b32.xlu0 %v920, 32
        %v968 = vpop.permute.xlu0 %967
        %vm985 = vcmask 294144
        %986 = vst.msk [vmem:[#allocation2] sm:$0xff] %vm985, %v938
        %987 = vst.msk [vmem:[#allocation2 + $0x8] sm:$0xff] %vm985, %v940
        %988 = vst.msk [vmem:[#allocation2 + $0x10] sm:$0xff] %vm985, %v942
        %989 = vst.msk [vmem:[#allocation2 + $0x18] sm:$0xff] %vm985, %v944
        %990 = vst.msk [vmem:[#allocation2 + $0x20] sm:$0xff] %vm985, %v946
        %991 = vst.msk [vmem:[#allocation2 + $0x28] sm:$0xff] %vm985, %v948
        %992 = vst.msk [vmem:[#allocation2 + $0x30] sm:$0xff] %vm985, %v950
        %993 = vst.msk [vmem:[#allocation2 + $0x38] sm:$0xff] %vm985, %v952
        %994 = vst.msk [vmem:[#allocation2 + $0x40] sm:$0xff] %vm985, %v954
        %995 = vst.msk [vmem:[#allocation2 + $0x48] sm:$0xff] %vm985, %v956
        %996 = vst.msk [vmem:[#allocation2 + $0x50] sm:$0xff] %vm985, %v958
        %997 = vst.msk [vmem:[#allocation2 + $0x58] sm:$0xff] %vm985, %v960
        %998 = vst.msk [vmem:[#allocation2 + $0x60] sm:$0xff] %vm985, %v962
        %999 = vst.msk [vmem:[#allocation2 + $0x68] sm:$0xff] %vm985, %v964
        %1000 = vst.msk [vmem:[#allocation2 + $0x70] sm:$0xff] %vm985, %v966
        %1001 = vst.msk [vmem:[#allocation2 + $0x78] sm:$0xff] %vm985, %v968
        %v1002 = vld [vmem:[#allocation2] sm:$0xff]
        %v1003 = vld [vmem:[#allocation2 + $0x8] sm:$0xff]
        %v1004 = vld [vmem:[#allocation2 + $0x10] sm:$0xff]
        %v1005 = vld [vmem:[#allocation2 + $0x18] sm:$0xff]
        %v1006 = vld [vmem:[#allocation2 + $0x20] sm:$0xff]
        %v1007 = vld [vmem:[#allocation2 + $0x28] sm:$0xff]
        %v1008 = vld [vmem:[#allocation2 + $0x30] sm:$0xff]
        %v1009 = vld [vmem:[#allocation2 + $0x38] sm:$0xff]
        %v1010 = vld [vmem:[#allocation2 + $0x40] sm:$0xff]
        %v1011 = vld [vmem:[#allocation2 + $0x48] sm:$0xff]
        %v1012 = vld [vmem:[#allocation2 + $0x50] sm:$0xff]
        %v1013 = vld [vmem:[#allocation2 + $0x58] sm:$0xff]
        %v1014 = vld [vmem:[#allocation2 + $0x60] sm:$0xff]
        %v1015 = vld [vmem:[#allocation2 + $0x68] sm:$0xff]
        %v1016 = vld [vmem:[#allocation2 + $0x70] sm:$0xff]
        %v1017 = vld [vmem:[#allocation2 + $0x78] sm:$0xff]
        %v1018 = vld [vmem:[%s1] sm:$0xff]
        %v1019 = vld [vmem:[%s1 + $0x8] sm:$0xff]
        %v1020 = vld [vmem:[%s1 + $0x10] sm:$0xff]
        %v1021 = vld [vmem:[%s1 + $0x18] sm:$0xff]
        %v1022 = vld [vmem:[%s1 + $0x20] sm:$0xf]
        %v1023 = vld [vmem:[%s2] sm:$0x1]
        %v1025 = vlaneseq
        %v1026 = vshrl.u32 %v1025, 7
        %v1027 = vsub.s32 0, %v1026
        %v1028 = vrot.slane %v1023, %v1027
        %vm1030 = vcmask 293888
        %v1032 = vsel %vm1030, %v1002, 0
        %v1035 = vsel %vm1030, %v1003, 0
        %v1038 = vsel %vm1030, %v1004, 0
        %v1041 = vsel %vm1030, %v1005, 0
        %v1044 = vsel %vm1030, %v1006, 0
        %v1047 = vsel %vm1030, %v1007, 0
        %v1050 = vsel %vm1030, %v1008, 0
        %v1053 = vsel %vm1030, %v1009, 0
        %v1056 = vsel %vm1030, %v1010, 0
        %v1059 = vsel %vm1030, %v1011, 0
        %v1062 = vsel %vm1030, %v1012, 0
        %v1065 = vsel %vm1030, %v1013, 0
        %v1068 = vsel %vm1030, %v1014, 0
        %v1071 = vsel %vm1030, %v1015, 0
        %v1074 = vsel %vm1030, %v1016, 0
        %v1077 = vsel %vm1030, %v1017, 0
        %vm1079 = vcmask 1043456
        %v1081 = vsel %vm1079, %v1022, 0
        %1083 = vmatprep.subr.mxu0 0.0
        %1084 = vmatpush1.msra.mxu0 %v1018
        %1085 = vmatprep.subr.mxu0 0.0
        %1086 = vmatpush1.msra.mxu0 %v1019
        %1087 = vmatprep.subr.mxu0 0.0
        %1088 = vmatpush1.msra.mxu0 %v1020
        %1089 = vmatprep.subr.mxu0 0.0
        %1090 = vmatpush1.msra.mxu0 %v1021
        %1091 = vmatprep.subr.mxu0 0.0
        %1092 = vmatpush1.msra.mxu0 %v1081
        %1093 = vmatprep.subr.mxu0 0.0
        %1094 = vmatpush1.msra.mxu0 0.0
        %1095 = vmatprep.subr.mxu0 0.0
        %1096 = vmatpush1.msra.mxu0 0.0
        %1097 = vmatprep.subr.mxu0 0.0
        %1098 = vmatpush1.msra.mxu0 0.0
        %1099 = vmatprep.subr.mxu0 0.0
        %1100 = vmatpush1.msra.mxu0 0.0
        %1101 = vmatprep.subr.mxu0 0.0
        %1102 = vmatpush1.msra.mxu0 0.0
        %1103 = vmatprep.subr.mxu0 0.0
        %1104 = vmatpush1.msra.mxu0 0.0
        %1105 = vmatprep.subr.mxu0 0.0
        %1106 = vmatpush1.msra.mxu0 0.0
        %1107 = vmatprep.subr.mxu0 0.0
        %1108 = vmatpush1.msra.mxu0 0.0
        %1109 = vmatprep.subr.mxu0 0.0
        %1110 = vmatpush1.msra.mxu0 0.0
        %1111 = vmatprep.subr.mxu0 0.0
        %1112 = vmatpush1.msra.mxu0 0.0
        %1113 = vmatprep.subr.mxu0 0.0
        %1114 = vmatpush1.msra.mxu0 0.0
        %1115 = vmatprep.subr.mxu0 0.0
        %1116 = vmatpush1.msra.mxu0 0.0
        %1117 = vmatprep.subr.mxu0 0.0
        %1118 = vmatpush1.msra.mxu0 0.0
        %1119 = vmatprep.subr.mxu0 0.0
        %1120 = vmatpush1.msra.mxu0 0.0
        %1121 = vmatprep.subr.mxu0 0.0
        %1122 = vmatpush1.msra.mxu0 0.0
        %1123 = vmatprep.subr.mxu0 0.0
        %1124 = vmatpush1.msra.mxu0 0.0
        %1125 = vmatprep.subr.mxu0 0.0
        %1126 = vmatpush1.msra.mxu0 0.0
        %1127 = vmatprep.subr.mxu0 0.0
        %1128 = vmatpush1.msra.mxu0 0.0
        %1129 = vmatprep.subr.mxu0 0.0
        %1130 = vmatpush1.msra.mxu0 0.0
        %1131 = vmatprep.subr.mxu0 0.0
        %1132 = vmatpush1.msra.mxu0 0.0
        %1133 = vmatprep.subr.mxu0 0.0
        %1134 = vmatpush1.msra.mxu0 0.0
        %1135 = vmatprep.subr.mxu0 0.0
        %1136 = vmatpush1.msra.mxu0 0.0
        %1137 = vmatprep.subr.mxu0 0.0
        %1138 = vmatpush1.msra.mxu0 0.0
        %1139 = vmatprep.subr.mxu0 0.0
        %1140 = vmatpush1.msra.mxu0 0.0
        %1141 = vmatprep.subr.mxu0 0.0
        %1142 = vmatpush1.msra.mxu0 0.0
        %1143 = vmatprep.subr.mxu0 0.0
        %1144 = vmatpush1.msra.mxu0 0.0
        %1145 = vmatprep.subr.mxu0 0.0
        %1146 = vmatpush1.msra.mxu0 0.0
        %1147 = vmatprep.mubr.f32.mxu0 0.0
        %1148 = vmatmul.mubr.f32.gmra.mrb[0].mxu0 %v1032
        %v1149 = vpop.f32.mrb[0].mxu0
        %v1150 = vadd.f32 %v1028, %v1149
        %v1151 = vpop.f32.mrb[0].mxu0
        %1152 = vmatprep.mubr.f32.mxu0 0.0
        %1153 = vmatmul.mubr.f32.gmra.mrb[0].mxu0 %v1035
        %v1154 = vpop.f32.mrb[0].mxu0
        %v1155 = vadd.f32 %v1028, %v1154
        %v1156 = vpop.f32.mrb[0].mxu0
        %1157 = vmatprep.mubr.f32.mxu0 0.0
        %1158 = vmatmul.mubr.f32.gmra.mrb[0].mxu0 %v1038
        %v1159 = vpop.f32.mrb[0].mxu0
        %v1160 = vadd.f32 %v1028, %v1159
        %v1161 = vpop.f32.mrb[0].mxu0
        %1162 = vmatprep.mubr.f32.mxu0 0.0
        %1163 = vmatmul.mubr.f32.gmra.mrb[0].mxu0 %v1041
        %v1164 = vpop.f32.mrb[0].mxu0
        %v1165 = vadd.f32 %v1028, %v1164
        %v1166 = vpop.f32.mrb[0].mxu0
        %1167 = vmatprep.mubr.f32.mxu0 0.0
        %1168 = vmatmul.mubr.f32.gmra.mrb[0].mxu0 %v1044
        %v1169 = vpop.f32.mrb[0].mxu0
        %v1170 = vadd.f32 %v1028, %v1169
        %v1171 = vpop.f32.mrb[0].mxu0
        %1172 = vmatprep.mubr.f32.mxu0 0.0
        %1173 = vmatmul.mubr.f32.gmra.mrb[0].mxu0 %v1047
        %v1174 = vpop.f32.mrb[0].mxu0
        %v1175 = vadd.f32 %v1028, %v1174
        %v1176 = vpop.f32.mrb[0].mxu0
        %1177 = vmatprep.mubr.f32.mxu0 0.0
        %1178 = vmatmul.mubr.f32.gmra.mrb[0].mxu0 %v1050
        %v1179 = vpop.f32.mrb[0].mxu0
        %v1180 = vadd.f32 %v1028, %v1179
        %v1181 = vpop.f32.mrb[0].mxu0
        %1182 = vmatprep.mubr.f32.mxu0 0.0
        %1183 = vmatmul.mubr.f32.gmra.mrb[0].mxu0 %v1053
        %v1184 = vpop.f32.mrb[0].mxu0
        %v1185 = vadd.f32 %v1028, %v1184
        %v1186 = vpop.f32.mrb[0].mxu0
        %1187 = vmatprep.mubr.f32.mxu0 0.0
        %1188 = vmatmul.mubr.f32.gmra.mrb[0].mxu0 %v1056
        %v1189 = vpop.f32.mrb[0].mxu0
        %v1190 = vadd.f32 %v1028, %v1189
        %v1191 = vpop.f32.mrb[0].mxu0
        %1192 = vmatprep.mubr.f32.mxu0 0.0
        %1193 = vmatmul.mubr.f32.gmra.mrb[0].mxu0 %v1059
        %v1194 = vpop.f32.mrb[0].mxu0
        %v1195 = vadd.f32 %v1028, %v1194
        %v1196 = vpop.f32.mrb[0].mxu0
        %1197 = vmatprep.mubr.f32.mxu0 0.0
        %1198 = vmatmul.mubr.f32.gmra.mrb[0].mxu0 %v1062
        %v1199 = vpop.f32.mrb[0].mxu0
        %v1200 = vadd.f32 %v1028, %v1199
        %v1201 = vpop.f32.mrb[0].mxu0
        %1202 = vmatprep.mubr.f32.mxu0 0.0
        %1203 = vmatmul.mubr.f32.gmra.mrb[0].mxu0 %v1065
        %v1204 = vpop.f32.mrb[0].mxu0
        %v1205 = vadd.f32 %v1028, %v1204
        %v1206 = vpop.f32.mrb[0].mxu0
        %1207 = vmatprep.mubr.f32.mxu0 0.0
        %1208 = vmatmul.mubr.f32.gmra.mrb[0].mxu0 %v1068
        %v1209 = vpop.f32.mrb[0].mxu0
        %v1210 = vadd.f32 %v1028, %v1209
        %v1211 = vpop.f32.mrb[0].mxu0
        %1212 = vmatprep.mubr.f32.mxu0 0.0
        %1213 = vmatmul.mubr.f32.gmra.mrb[0].mxu0 %v1071
        %v1214 = vpop.f32.mrb[0].mxu0
        %v1215 = vadd.f32 %v1028, %v1214
        %v1216 = vpop.f32.mrb[0].mxu0
        %1217 = vmatprep.mubr.f32.mxu0 0.0
        %1218 = vmatmul.mubr.f32.gmra.mrb[0].mxu0 %v1074
        %v1219 = vpop.f32.mrb[0].mxu0
        %v1220 = vadd.f32 %v1028, %v1219
        %v1221 = vpop.f32.mrb[0].mxu0
        %1222 = vmatprep.mubr.f32.mxu0 0.0
        %1223 = vmatmul.mubr.f32.gmra.mrb[0].mxu0 %v1077
        %v1224 = vpop.f32.mrb[0].mxu0
        %v1225 = vadd.f32 %v1028, %v1224
        %v1226 = vpop.f32.mrb[0].mxu0
        %1227 = vdwg.mxu0
        %v1228 = vmul.f32 %v1150, 0.5
        %v1229 = vmul.f32 %v1155, 0.5
        %v1230 = vmul.f32 %v1160, 0.5
        %v1231 = vmul.f32 %v1165, 0.5
        %v1232 = vmul.f32 %v1170, 0.5
        %v1233 = vmul.f32 %v1175, 0.5
        %v1234 = vmul.f32 %v1180, 0.5
        %v1235 = vmul.f32 %v1185, 0.5
        %v1236 = vmul.f32 %v1190, 0.5
        %v1237 = vmul.f32 %v1195, 0.5
        %v1238 = vmul.f32 %v1200, 0.5
        %v1239 = vmul.f32 %v1205, 0.5
        %v1240 = vmul.f32 %v1210, 0.5
        %v1241 = vmul.f32 %v1215, 0.5
        %v1242 = vmul.f32 %v1220, 0.5
        %v1243 = vmul.f32 %v1225, 0.5
        %v1244 = vmul.f32 %v1150, 0.70710677
        %v1245 = vmul.f32 %v1155, 0.70710677
        %v1246 = vmul.f32 %v1160, 0.70710677
        %v1247 = vmul.f32 %v1165, 0.70710677
        %v1248 = vmul.f32 %v1170, 0.70710677
        %v1249 = vmul.f32 %v1175, 0.70710677
        %v1250 = vmul.f32 %v1180, 0.70710677
        %v1251 = vmul.f32 %v1185, 0.70710677
        %v1252 = vmul.f32 %v1190, 0.70710677
        %v1253 = vmul.f32 %v1195, 0.70710677
        %v1254 = vmul.f32 %v1200, 0.70710677
        %v1255 = vmul.f32 %v1205, 0.70710677
        %v1256 = vmul.f32 %v1210, 0.70710677
        %v1257 = vmul.f32 %v1215, 0.70710677
        %v1258 = vmul.f32 %v1220, 0.70710677
        %v1259 = vmul.f32 %v1225, 0.70710677
        %v1260 = verf.f32.pop %v1244
        %v1261 = verf.f32.pop %v1245
        %v1262 = verf.f32.pop %v1246
        %v1263 = verf.f32.pop %v1247
        %v1264 = verf.f32.pop %v1248
        %v1265 = verf.f32.pop %v1249
        %v1266 = verf.f32.pop %v1250
        %v1267 = verf.f32.pop %v1251
        %v1268 = verf.f32.pop %v1252
        %v1269 = verf.f32.pop %v1253
        %v1270 = verf.f32.pop %v1254
        %v1271 = verf.f32.pop %v1255
        %v1272 = verf.f32.pop %v1256
        %v1273 = verf.f32.pop %v1257
        %v1274 = verf.f32.pop %v1258
        %v1275 = verf.f32.pop %v1259
        %v1276 = vadd.f32 %v1260, 1.0
        %v1277 = vadd.f32 %v1261, 1.0
        %v1278 = vadd.f32 %v1262, 1.0
        %v1279 = vadd.f32 %v1263, 1.0
        %v1280 = vadd.f32 %v1264, 1.0
        %v1281 = vadd.f32 %v1265, 1.0
        %v1282 = vadd.f32 %v1266, 1.0
        %v1283 = vadd.f32 %v1267, 1.0
        %v1284 = vadd.f32 %v1268, 1.0
        %v1285 = vadd.f32 %v1269, 1.0
        %v1286 = vadd.f32 %v1270, 1.0
        %v1287 = vadd.f32 %v1271, 1.0
        %v1288 = vadd.f32 %v1272, 1.0
        %v1289 = vadd.f32 %v1273, 1.0
        %v1290 = vadd.f32 %v1274, 1.0
        %v1291 = vadd.f32 %v1275, 1.0
        %v1292 = vmul.f32 %v1228, %v1276
        %v1293 = vmul.f32 %v1229, %v1277
        %v1294 = vmul.f32 %v1230, %v1278
        %v1295 = vmul.f32 %v1231, %v1279
        %v1296 = vmul.f32 %v1232, %v1280
        %v1297 = vmul.f32 %v1233, %v1281
        %v1298 = vmul.f32 %v1234, %v1282
        %v1299 = vmul.f32 %v1235, %v1283
        %v1300 = vmul.f32 %v1236, %v1284
        %v1301 = vmul.f32 %v1237, %v1285
        %v1302 = vmul.f32 %v1238, %v1286
        %v1303 = vmul.f32 %v1239, %v1287
        %v1304 = vmul.f32 %v1240, %v1288
        %v1305 = vmul.f32 %v1241, %v1289
        %v1306 = vmul.f32 %v1242, %v1290
        %v1307 = vmul.f32 %v1243, %v1291
        %1308 = vst [vmem:[%s177] sm:$0xff] %v1292
        %1309 = vst [vmem:[%s177 + $0x8] sm:$0xff] %v1293
        %1310 = vst [vmem:[%s177 + $0x10] sm:$0xff] %v1294
        %1311 = vst [vmem:[%s177 + $0x18] sm:$0xff] %v1295
        %1312 = vst [vmem:[%s177 + $0x20] sm:$0xff] %v1296
        %1313 = vst [vmem:[%s177 + $0x28] sm:$0xff] %v1297
        %1314 = vst [vmem:[%s177 + $0x30] sm:$0xff] %v1298
        %1315 = vst [vmem:[%s177 + $0x38] sm:$0xff] %v1299
        %1316 = vst [vmem:[%s177 + $0x40] sm:$0xff] %v1300
        %1317 = vst [vmem:[%s177 + $0x48] sm:$0xff] %v1301
        %1318 = vst [vmem:[%s177 + $0x50] sm:$0xff] %v1302
        %1319 = vst [vmem:[%s177 + $0x58] sm:$0xff] %v1303
        %1320 = vst [vmem:[%s177 + $0x60] sm:$0xff] %v1304
        %1321 = vst [vmem:[%s177 + $0x68] sm:$0xff] %v1305
        %1322 = vst [vmem:[%s177 + $0x70] sm:$0xff] %v1306
        %1323 = vst [vmem:[%s177 + $0x78] sm:$0xff] %v1307
        %s1324 = sand.u32 %s107, 1
        %s1325 = scalar_lea.sflag [#allocation4], %s1324
        %s1326 = sand.u32 %s107, 1
        %s1327 = smul.addr %s1326, 128
        %s1328 = scalar_lea.vmem [#allocation3], %s1327
        // Predicated region
        $region33: #{tpu_custom_call.1} parent=31 // pred_check
          %p1329 = pneg %p117
        $region34: #{tpu_custom_call.1} parent=31 // pred_check_branch
          %1331 = sbr.rel (%p1329) target = $region36
        $region35: #{tpu_custom_call.1} parent=31 // pred_region
          %s1332 = smul.u32 8, %s22
          %s1334 = ssub.s32 2048, 2048
          %1335 = vsyncadd %s1325, %s1334
          %s1336 = smul.addr %s1332, 2
          %s1337 = smul.addr %s21, 32
          %s1338 = sadd.s32 %s1336, %s1337
          %s1339 = smul.addr %s1338, 128
          %s1340 = scalar_lea.hbm %s3, %s1339
          %s1341 = sshll.u32 %s1328, 4
          %s1342 = int_to_ptr.vmem [resolvable:$true] %s1341
          %1347 = dma.vmem_to_hbm [thread:$0]  %s1342, 2048, %s1340, %s1325, 128, 128, 8
        $region36: #{tpu_custom_call.1} parent=31 // pred_fallthru
          _
      $region32: #{tpu_custom_call.1} parent=5 // pred_fallthru
        _
      %p1348 = scmp.le.s32.totalorder 2, %s12
      // Predicated region
      $region37: #{tpu_custom_call.1} parent=5 // pred_check
        %p1349 = pneg %p1348
      $region38: #{tpu_custom_call.1} parent=5 // pred_check_branch
        %1351 = sbr.rel (%p1349) target = $region40
      $region39: #{tpu_custom_call.1} parent=5 // pred_region
        %s1352 = ssub.s32 %s12, 2
        // Predicated region
        $region41: #{tpu_custom_call.1} parent=39 // pred_check
          %p1353 = pneg %p123
        $region42: #{tpu_custom_call.1} parent=39 // pred_check_branch
          %1355 = sbr.rel (%p1353) target = $region44
        $region43: #{tpu_custom_call.1} parent=39 // pred_region
          %s1356 = sand.u32 %s108, 1
          %s1357 = scalar_lea.sflag [#allocation4], %s1356
          %s1358 = sand.u32 %s108, 1
          %s1359 = smul.addr %s1358, 128
          %s1360 = scalar_lea.vmem [#allocation3], %s1359
          %1361 = dma.done %s1357, 2048
        $region44: #{tpu_custom_call.1} parent=39 // pred_fallthru
          _
      $region40: #{tpu_custom_call.1} parent=5 // pred_fallthru
        _
    $region6: #{tpu_custom_call.1} parent=1 // loop_footer
      %s16 = sadd.s32 1, %s12
    $region7: #{tpu_custom_call.1} parent=1 // loop_footer_branch
      %11 = sbr.rel target = $region3
    $region8: #{tpu_custom_call.1} parent=1 // loop_exit
      _
    %1362 = vsyncpa [#allocation4], 1
    %s1363 = scalar_lea.sflag [#allocation4], 1
    %1364 = vsyncpa %s1363, 1

</llo_original>
